<compile_context>
chip_gen: v7x
topology: tpu7x:2x2x1
jax: 0.10.0
libtpu: 0.0.40
codegen_flags: <defaults>
</compile_context>

<pallas_src>
import numpy as np
import jax
import jax.numpy as jnp
from jax.experimental import pallas as pl
from jax.experimental.pallas import tpu as pltpu

# ---------------- model config (small, consistent with ViT.__init__) ----------------
IMAGE_SIZE = 16
PATCH_SIZE = 8
CHANNELS = 4
NUM_CLASSES = 10
DIM = 32
DEPTH = 2
HEADS = 4
DIM_HEAD = 8
MLP_DIM = 64
POOL = "cls"

NUM_PATCHES = (IMAGE_SIZE // PATCH_SIZE) ** 2        # 4
PATCH_DIM = CHANNELS * PATCH_SIZE * PATCH_SIZE       # 256
INNER_DIM = HEADS * DIM_HEAD                         # 32
SEQ = NUM_PATCHES + 1                                # 5
LN_EPS = 1e-5
ATTN_SCALE = DIM_HEAD ** -0.5
NEG_INF = -1e30

PARAMS_PER_LAYER = 11


# ---------------- in-kernel math helpers (rank-2 only, f32) ----------------
def _ln(x, g, b):
    # PyTorch nn.LayerNorm: biased variance, eps=1e-5, per-last-dim affine.
    mu = jnp.mean(x, axis=-1, keepdims=True)
    var = jnp.mean(jnp.square(x - mu), axis=-1, keepdims=True)
    return (x - mu) * jax.lax.rsqrt(var + LN_EPS) * g + b


def _erf(x):
    # TODO(synk): exact-GELU erf via Abramowitz&Stegun 7.1.26 polynomial
    # (abs err ~1.5e-7); lax.erf lowering in Mosaic is not guaranteed.
    a1, a2, a3, a4, a5 = 0.254829592, -0.284496736, 1.421413741, -1.453152027, 1.061405429
    p = 0.3275911
    ax = jnp.abs(x)
    t = 1.0 / (1.0 + p * ax)
    poly = ((((a5 * t + a4) * t + a3) * t + a2) * t + a1) * t
    y = 1.0 - poly * jnp.exp(-ax * ax)
    return jnp.where(x >= 0, y, -y)


def _gelu(x):
    # PyTorch nn.GELU() default (exact, erf-based).
    return 0.5 * x * (1.0 + _erf(x * 0.7071067811865476))


# ---------------- the single fused kernel ----------------
def vit_kernel(*refs):
    # refs = [patches, 3 attention constants, 8 embed params,
    #         DEPTH*11 layer params, 4 tail params, out]
    o_ref = refs[-1]
    (patches_ref, mask_hv_ref, batch_bias_ref, blockmat_ref,
     pe_g1, pe_b1, pe_w, pe_b, pe_g2, pe_b2, cls_ref, pos_ref) = refs[:12]
    layers = [refs[12 + i * PARAMS_PER_LAYER: 12 + (i + 1) * PARAMS_PER_LAYER]
              for i in range(DEPTH)]
    tail0 = 12 + DEPTH * PARAMS_PER_LAYER
    norm_g, norm_b, head_w, head_b = refs[tail0: tail0 + 4]

    B = patches_ref.shape[0] // NUM_PATCHES  # static

    # ---- patch embedding: LayerNorm(patch_dim) -> Linear -> LayerNorm(dim) ----
    pe = _ln(patches_ref[...], pe_g1[...], pe_b1[...])
    pe = jnp.dot(pe, pe_w[...], preferred_element_type=jnp.float32) + pe_b[...]
    pe = _ln(pe, pe_g2[...], pe_b2[...])                       # (B*NP, DIM)

    # ---- cls token concat + positional embedding (built in VMEM) ----
    cls = cls_ref[...]                                         # (1, DIM)
    pos = pos_ref[...]                                         # (SEQ, DIM)
    rows = []
    for b in range(B):
        rows.append(cls)
        rows.append(pe[b * NUM_PATCHES:(b + 1) * NUM_PATCHES, :])
    x = jnp.concatenate(rows, axis=0)                          # (B*SEQ, DIM)
    x = x + jnp.tile(pos, (B, 1))

    # ---- attention constants (VMEM resident, shared by all layers) ----
    mask_hv = mask_hv_ref[...]     # (HEADS*B*SEQ, INNER)  head block mask (0/1)
    bias = batch_bias_ref[...]     # (B*SEQ, HEADS*B*SEQ)  0 / -1e30 cross-batch
    blockmat = blockmat_ref[...]   # (HEADS*B*SEQ,)^2      0/1 per-head-block sum

    # ---- transformer layers ----
    for (a_g, a_b, w_qkv, w_out, b_out, f_g, f_b, w1, b1, w2, b2) in layers:
        # Attention pre-norm + fused qkv projection (MXU).
        xn = _ln(x, a_g[...], a_b[...])
        qkv = jnp.dot(xn, w_qkv[...], preferred_element_type=jnp.float32)  # (B*SEQ, 3*INNER)
        q = qkv[:, :INNER_DIM]
        k = qkv[:, INNER_DIM:2 * INNER_DIM]
        v = qkv[:, 2 * INNER_DIM:]

        # Head-blocked K / V: row h*B*SEQ + j holds token j restricted to head h.
        k_blk = jnp.tile(k, (HEADS, 1)) * mask_hv              # (H*B*SEQ, INNER)
        v_blk = jnp.tile(v, (HEADS, 1)) * mask_hv              # (H*B*SEQ, INNER)

        # All heads' scores in one matmul; cross-batch keys masked via bias.
        s = (jnp.dot(q, k_blk.T, preferred_element_type=jnp.float32)
             * ATTN_SCALE + bias)                              # (B*SEQ, H*B*SEQ)
        m = jnp.max(s, axis=-1, keepdims=True)
        e = jnp.exp(s - m)
        # Per (row, head-block) denominator, broadcast back to full width via
        # one matmul with the constant 0/1 block matrix.
        denom = jnp.dot(e, blockmat, preferred_element_type=jnp.float32)
        p = e * pl.reciprocal(denom, approx=True)
        # attn @ V with head merge fused into one matmul.
        attn = jnp.dot(p, v_blk, preferred_element_type=jnp.float32)      # (B*SEQ, INNER)

        # out projection + residual
        x = jnp.dot(attn, w_out[...], preferred_element_type=jnp.float32) + b_out[...] + x

        # FeedForward: LN -> Linear -> GELU -> Linear, + residual
        hfx = _ln(x, f_g[...], f_b[...])
        hfx = jnp.dot(hfx, w1[...], preferred_element_type=jnp.float32) + b1[...]
        hfx = _gelu(hfx)
        x = jnp.dot(hfx, w2[...], preferred_element_type=jnp.float32) + b2[...] + x

    # ---- final transformer LayerNorm ----
    x = _ln(x, norm_g[...], norm_b[...])

    # ---- pool ('cls' token per batch, or mean over tokens) ----
    if POOL == "mean":
        pooled = jnp.concatenate(
            [jnp.mean(x[b * SEQ:(b + 1) * SEQ, :], axis=0, keepdims=True) for b in range(B)],
            axis=0)
    else:
        pooled = jnp.concatenate([x[b * SEQ:b * SEQ + 1, :] for b in range(B)], axis=0)

    # ---- mlp_head ----
    o_ref[...] = (jnp.dot(pooled, head_w[...], preferred_element_type=jnp.float32)
                  + head_b[...])


# ---------------- constant attention-structure matrices (host, numpy) ----------------
def build_attention_constants(B):
    BS = B * SEQ
    HB = HEADS * BS
    r = np.arange(HB)
    h_of_r = r // BS                 # head of blocked row
    j_of_r = r % BS                  # token index of blocked row
    d = np.arange(INNER_DIM)
    h_of_d = d // DIM_HEAD           # head of feature column

    # (HB, INNER): 1 where blocked row's head owns that feature column.
    mask_hv = (h_of_r[:, None] == h_of_d[None, :]).astype(np.float32)

    # (BS, HB): 0 where query and key tokens are in the same batch, else -1e30.
    i = np.arange(BS)
    b_of_i = i // SEQ
    b_of_j = j_of_r // SEQ
    batch_bias = np.where(b_of_i[:, None] == b_of_j[None, :], 0.0, NEG_INF).astype(np.float32)

    # (HB, HB): 1 where both blocked columns belong to the same head block.
    blockmat = (h_of_r[:, None] == h_of_r[None, :]).astype(np.float32)

    return (jnp.asarray(mask_hv), jnp.asarray(batch_bias), jnp.asarray(blockmat))


# ---------------- parameters (deterministic, in-script) ----------------
def init_params(key):
    state = {"key": key}

    def nxt():
        state["key"], sub = jax.random.split(state["key"])
        return sub

    def dense(shape, scale=0.02):
        return (scale * jax.random.normal(nxt(), shape)).astype(jnp.float32)

    p = {
        "pe_ln1_g": jnp.ones((1, PATCH_DIM), jnp.float32),
        "pe_ln1_b": jnp.zeros((1, PATCH_DIM), jnp.float32),
        "pe_w": dense((PATCH_DIM, DIM)),
        "pe_b": jnp.zeros((1, DIM), jnp.float32),
        "pe_ln2_g": jnp.ones((1, DIM), jnp.float32),
        "pe_ln2_b": jnp.zeros((1, DIM), jnp.float32),
        "cls_token": dense((1, DIM), scale=1.0),    # torch.randn
        "pos_emb": dense((SEQ, DIM), scale=1.0),    # torch.randn
        "norm_g": jnp.ones((1, DIM), jnp.float32),
        "norm_b": jnp.zeros((1, DIM), jnp.float32),
        "head_w": dense((DIM, NUM_CLASSES)),
        "head_b": jnp.zeros((1, NUM_CLASSES), jnp.float32),
    }
    layers = []
    for _ in range(DEPTH):
        layers.append(dict(
            attn_ln_g=jnp.ones((1, DIM), jnp.float32),
            attn_ln_b=jnp.zeros((1, DIM), jnp.float32),
            w_qkv=dense((DIM, 3 * INNER_DIM)),           # to_qkv, no bias
            w_out=dense((INNER_DIM, DIM)),
            b_out=jnp.zeros((1, DIM), jnp.float32),
            ff_ln_g=jnp.ones((1, DIM), jnp.float32),
            ff_ln_b=jnp.zeros((1, DIM), jnp.float32),
            w1=dense((DIM, MLP_DIM)),
            b1=jnp.zeros((1, MLP_DIM), jnp.float32),
            w2=dense((MLP_DIM, DIM)),
            b2=jnp.zeros((1, DIM), jnp.float32),
        ))
    p["layers"] = layers
    return p


# ---------------- forward pass: one fused pallas_call ----------------
def vit_forward(img, params):
    B = img.shape[0]

    # Rearrange 'b c (h p1) (w p2) -> b (h w) (p1 p2 c)' — single XLA layout copy
    # feeding the fused kernel.
    x = img.reshape(B, CHANNELS, IMAGE_SIZE // PATCH_SIZE, PATCH_SIZE,
                    IMAGE_SIZE // PATCH_SIZE, PATCH_SIZE)
    patches = x.transpose(0, 2, 4, 3, 5, 1).reshape(B * NUM_PATCHES, PATCH_DIM)

    mask_hv, batch_bias, blockmat = build_attention_constants(B)

    flat = [patches, mask_hv, batch_bias, blockmat,
            params["pe_ln1_g"], params["pe_ln1_b"], params["pe_w"], params["pe_b"],
            params["pe_ln2_g"], params["pe_ln2_b"],
            params["cls_token"], params["pos_emb"]]
    for lyr in params["layers"]:
        flat += [lyr["attn_ln_g"], lyr["attn_ln_b"], lyr["w_qkv"], lyr["w_out"], lyr["b_out"],
                 lyr["ff_ln_g"], lyr["ff_ln_b"], lyr["w1"], lyr["b1"], lyr["w2"], lyr["b2"]]
    flat += [params["norm_g"], params["norm_b"], params["head_w"], params["head_b"]]

    # Everything (weights + activations + constants) is well under 1 MiB, so all
    # arrays live in VMEM and the kernel runs once (grid = ()).
    return pl.pallas_call(
        vit_kernel,
        out_shape=jax.ShapeDtypeStruct((B, NUM_CLASSES), jnp.float32),
        in_specs=[pl.BlockSpec(memory_space=pltpu.MemorySpace.VMEM)] * len(flat),
        out_specs=pl.BlockSpec(memory_space=pltpu.MemorySpace.VMEM),
    )(*flat)


if __name__ == "__main__":
    key = jax.random.PRNGKey(0)
    pkey, xkey = jax.random.split(key)
    params = init_params(pkey)
    img = jax.random.normal(xkey, (2, CHANNELS, IMAGE_SIZE, IMAGE_SIZE), jnp.float32)

    logits = jax.jit(vit_forward)(img, params)
    jax.block_until_ready(logits)
    assert logits.shape == (2, NUM_CLASSES), logits.shape
    assert bool(jnp.all(jnp.isfinite(logits)))
    print("KERNEL_OK")
</pallas_src>

<mosaic_0001>
module attributes {stable_mosaic.version = 11 : i64} {
  func.func @vit_kernel(%arg0: memref<8x256xf32, #tpu.memory_space<vmem>>, %arg1: memref<40x32xf32, #tpu.memory_space<vmem>>, %arg2: memref<10x40xf32, #tpu.memory_space<vmem>>, %arg3: memref<40x40xf32, #tpu.memory_space<vmem>>, %arg4: memref<1x256xf32, #tpu.memory_space<vmem>>, %arg5: memref<1x256xf32, #tpu.memory_space<vmem>>, %arg6: memref<256x32xf32, #tpu.memory_space<vmem>>, %arg7: memref<1x32xf32, #tpu.memory_space<vmem>>, %arg8: memref<1x32xf32, #tpu.memory_space<vmem>>, %arg9: memref<1x32xf32, #tpu.memory_space<vmem>>, %arg10: memref<1x32xf32, #tpu.memory_space<vmem>>, %arg11: memref<5x32xf32, #tpu.memory_space<vmem>>, %arg12: memref<1x32xf32, #tpu.memory_space<vmem>>, %arg13: memref<1x32xf32, #tpu.memory_space<vmem>>, %arg14: memref<32x96xf32, #tpu.memory_space<vmem>>, %arg15: memref<32x32xf32, #tpu.memory_space<vmem>>, %arg16: memref<1x32xf32, #tpu.memory_space<vmem>>, %arg17: memref<1x32xf32, #tpu.memory_space<vmem>>, %arg18: memref<1x32xf32, #tpu.memory_space<vmem>>, %arg19: memref<32x64xf32, #tpu.memory_space<vmem>>, %arg20: memref<1x64xf32, #tpu.memory_space<vmem>>, %arg21: memref<64x32xf32, #tpu.memory_space<vmem>>, %arg22: memref<1x32xf32, #tpu.memory_space<vmem>>, %arg23: memref<1x32xf32, #tpu.memory_space<vmem>>, %arg24: memref<1x32xf32, #tpu.memory_space<vmem>>, %arg25: memref<32x96xf32, #tpu.memory_space<vmem>>, %arg26: memref<32x32xf32, #tpu.memory_space<vmem>>, %arg27: memref<1x32xf32, #tpu.memory_space<vmem>>, %arg28: memref<1x32xf32, #tpu.memory_space<vmem>>, %arg29: memref<1x32xf32, #tpu.memory_space<vmem>>, %arg30: memref<32x64xf32, #tpu.memory_space<vmem>>, %arg31: memref<1x64xf32, #tpu.memory_space<vmem>>, %arg32: memref<64x32xf32, #tpu.memory_space<vmem>>, %arg33: memref<1x32xf32, #tpu.memory_space<vmem>>, %arg34: memref<1x32xf32, #tpu.memory_space<vmem>>, %arg35: memref<1x32xf32, #tpu.memory_space<vmem>>, %arg36: memref<32x10xf32, #tpu.memory_space<vmem>>, %arg37: memref<1x10xf32, #tpu.memory_space<vmem>>, %arg38: memref<2x10xf32, #tpu.memory_space<vmem>>) attributes {dimension_semantics = [], scalar_prefetch = 0 : i64, scratch_operands = 0 : i64, tpu.core_type = #tpu.core_type<tc>} {
    %c0 = arith.constant 0 : index
    %c0_0 = arith.constant 0 : index
    %0 = vector.load %arg0[%c0, %c0_0] : memref<8x256xf32, #tpu.memory_space<vmem>>, vector<8x256xf32>
    %c0_1 = arith.constant 0 : index
    %c0_2 = arith.constant 0 : index
    %1 = vector.load %arg4[%c0_1, %c0_2] : memref<1x256xf32, #tpu.memory_space<vmem>>, vector<1x256xf32>
    %c0_3 = arith.constant 0 : index
    %c0_4 = arith.constant 0 : index
    %2 = vector.load %arg5[%c0_3, %c0_4] : memref<1x256xf32, #tpu.memory_space<vmem>>, vector<1x256xf32>
    %cst = arith.constant dense<0.000000e+00> : vector<8xf32>
    %3 = vector.multi_reduction <add>, %0, %cst [1] : vector<8x256xf32> to vector<8xf32>
    %4 = vector.shape_cast %3 : vector<8xf32> to vector<8x1xf32>
    %cst_5 = arith.constant 2.560000e+02 : f32
    %5 = vector.broadcast %cst_5 : f32 to vector<8x1xf32>
    %6 = arith.divf %4, %5 : vector<8x1xf32>
    %7 = vector.broadcast %6 : vector<8x1xf32> to vector<8x256xf32>
    %8 = arith.subf %0, %7 : vector<8x256xf32>
    %9 = arith.mulf %8, %8 : vector<8x256xf32>
    %cst_6 = arith.constant dense<0.000000e+00> : vector<8xf32>
    %10 = vector.multi_reduction <add>, %9, %cst_6 [1] : vector<8x256xf32> to vector<8xf32>
    %11 = vector.shape_cast %10 : vector<8xf32> to vector<8x1xf32>
    %cst_7 = arith.constant 2.560000e+02 : f32
    %12 = vector.broadcast %cst_7 : f32 to vector<8x1xf32>
    %13 = arith.divf %11, %12 : vector<8x1xf32>
    %14 = vector.broadcast %6 : vector<8x1xf32> to vector<8x256xf32>
    %15 = arith.subf %0, %14 : vector<8x256xf32>
    %cst_8 = arith.constant 9.99999974E-6 : f32
    %16 = vector.broadcast %cst_8 : f32 to vector<8x1xf32>
    %17 = arith.addf %13, %16 : vector<8x1xf32>
    %18 = math.rsqrt %17 : vector<8x1xf32>
    %19 = vector.broadcast %18 : vector<8x1xf32> to vector<8x256xf32>
    %20 = arith.mulf %15, %19 : vector<8x256xf32>
    %21 = vector.broadcast %1 : vector<1x256xf32> to vector<8x256xf32>
    %22 = arith.mulf %20, %21 : vector<8x256xf32>
    %23 = vector.broadcast %2 : vector<1x256xf32> to vector<8x256xf32>
    %24 = arith.addf %22, %23 : vector<8x256xf32>
    %c0_9 = arith.constant 0 : index
    %c0_10 = arith.constant 0 : index
    %25 = vector.load %arg6[%c0_9, %c0_10] : memref<256x32xf32, #tpu.memory_space<vmem>>, vector<256x32xf32>
    %cst_11 = arith.constant dense<0.000000e+00> : vector<8x32xf32>
    %26 = tpu.matmul %24, %25, %cst_11 {dimension_numbers = #tpu.dot_dimension_numbers<[1], [0], [0], [1], [0, 0, 1, 1], [], []>} : vector<8x256xf32>, vector<256x32xf32>, vector<8x32xf32> -> vector<8x32xf32>
    %c0_12 = arith.constant 0 : index
    %c0_13 = arith.constant 0 : index
    %27 = vector.load %arg7[%c0_12, %c0_13] : memref<1x32xf32, #tpu.memory_space<vmem>>, vector<1x32xf32>
    %28 = vector.broadcast %27 : vector<1x32xf32> to vector<8x32xf32>
    %29 = arith.addf %26, %28 : vector<8x32xf32>
    %c0_14 = arith.constant 0 : index
    %c0_15 = arith.constant 0 : index
    %30 = vector.load %arg8[%c0_14, %c0_15] : memref<1x32xf32, #tpu.memory_space<vmem>>, vector<1x32xf32>
    %c0_16 = arith.constant 0 : index
    %c0_17 = arith.constant 0 : index
    %31 = vector.load %arg9[%c0_16, %c0_17] : memref<1x32xf32, #tpu.memory_space<vmem>>, vector<1x32xf32>
    %cst_18 = arith.constant dense<0.000000e+00> : vector<8xf32>
    %32 = vector.multi_reduction <add>, %29, %cst_18 [1] : vector<8x32xf32> to vector<8xf32>
    %33 = vector.shape_cast %32 : vector<8xf32> to vector<8x1xf32>
    %cst_19 = arith.constant 3.200000e+01 : f32
    %34 = vector.broadcast %cst_19 : f32 to vector<8x1xf32>
    %35 = arith.divf %33, %34 : vector<8x1xf32>
    %36 = vector.broadcast %35 : vector<8x1xf32> to vector<8x32xf32>
    %37 = arith.subf %29, %36 : vector<8x32xf32>
    %38 = arith.mulf %37, %37 : vector<8x32xf32>
    %cst_20 = arith.constant dense<0.000000e+00> : vector<8xf32>
    %39 = vector.multi_reduction <add>, %38, %cst_20 [1] : vector<8x32xf32> to vector<8xf32>
    %40 = vector.shape_cast %39 : vector<8xf32> to vector<8x1xf32>
    %cst_21 = arith.constant 3.200000e+01 : f32
    %41 = vector.broadcast %cst_21 : f32 to vector<8x1xf32>
    %42 = arith.divf %40, %41 : vector<8x1xf32>
    %43 = vector.broadcast %35 : vector<8x1xf32> to vector<8x32xf32>
    %44 = arith.subf %29, %43 : vector<8x32xf32>
    %cst_22 = arith.constant 9.99999974E-6 : f32
    %45 = vector.broadcast %cst_22 : f32 to vector<8x1xf32>
    %46 = arith.addf %42, %45 : vector<8x1xf32>
    %47 = math.rsqrt %46 : vector<8x1xf32>
    %48 = vector.broadcast %47 : vector<8x1xf32> to vector<8x32xf32>
    %49 = arith.mulf %44, %48 : vector<8x32xf32>
    %50 = vector.broadcast %30 : vector<1x32xf32> to vector<8x32xf32>
    %51 = arith.mulf %49, %50 : vector<8x32xf32>
    %52 = vector.broadcast %31 : vector<1x32xf32> to vector<8x32xf32>
    %53 = arith.addf %51, %52 : vector<8x32xf32>
    %c0_23 = arith.constant 0 : index
    %c0_24 = arith.constant 0 : index
    %54 = vector.load %arg10[%c0_23, %c0_24] : memref<1x32xf32, #tpu.memory_space<vmem>>, vector<1x32xf32>
    %c0_25 = arith.constant 0 : index
    %c0_26 = arith.constant 0 : index
    %55 = vector.load %arg11[%c0_25, %c0_26] : memref<5x32xf32, #tpu.memory_space<vmem>>, vector<5x32xf32>
    %56 = vector.extract_strided_slice %53 {offsets = [0, 0], sizes = [4, 32], strides = [1, 1]} : vector<8x32xf32> to vector<4x32xf32>
    %57 = vector.extract_strided_slice %53 {offsets = [4, 0], sizes = [4, 32], strides = [1, 1]} : vector<8x32xf32> to vector<4x32xf32>
    %58 = tpu.concatenate %54, %56, %54, %57 in 0 : vector<1x32xf32>, vector<4x32xf32>, vector<1x32xf32>, vector<4x32xf32> -> vector<10x32xf32>
    %59 = tpu.concatenate %55, %55 in 0 : vector<5x32xf32>, vector<5x32xf32> -> vector<10x32xf32>
    %60 = arith.addf %58, %59 : vector<10x32xf32>
    %c0_27 = arith.constant 0 : index
    %c0_28 = arith.constant 0 : index
    %61 = vector.load %arg1[%c0_27, %c0_28] : memref<40x32xf32, #tpu.memory_space<vmem>>, vector<40x32xf32>
    %c0_29 = arith.constant 0 : index
    %c0_30 = arith.constant 0 : index
    %62 = vector.load %arg2[%c0_29, %c0_30] : memref<10x40xf32, #tpu.memory_space<vmem>>, vector<10x40xf32>
    %c0_31 = arith.constant 0 : index
    %c0_32 = arith.constant 0 : index
    %63 = vector.load %arg3[%c0_31, %c0_32] : memref<40x40xf32, #tpu.memory_space<vmem>>, vector<40x40xf32>
    %c0_33 = arith.constant 0 : index
    %c0_34 = arith.constant 0 : index
    %64 = vector.load %arg12[%c0_33, %c0_34] : memref<1x32xf32, #tpu.memory_space<vmem>>, vector<1x32xf32>
    %c0_35 = arith.constant 0 : index
    %c0_36 = arith.constant 0 : index
    %65 = vector.load %arg13[%c0_35, %c0_36] : memref<1x32xf32, #tpu.memory_space<vmem>>, vector<1x32xf32>
    %cst_37 = arith.constant dense<0.000000e+00> : vector<10xf32>
    %66 = vector.multi_reduction <add>, %60, %cst_37 [1] : vector<10x32xf32> to vector<10xf32>
    %67 = vector.shape_cast %66 : vector<10xf32> to vector<10x1xf32>
    %cst_38 = arith.constant 3.200000e+01 : f32
    %68 = vector.broadcast %cst_38 : f32 to vector<10x1xf32>
    %69 = arith.divf %67, %68 : vector<10x1xf32>
    %70 = vector.broadcast %69 : vector<10x1xf32> to vector<10x32xf32>
    %71 = arith.subf %60, %70 : vector<10x32xf32>
    %72 = arith.mulf %71, %71 : vector<10x32xf32>
    %cst_39 = arith.constant dense<0.000000e+00> : vector<10xf32>
    %73 = vector.multi_reduction <add>, %72, %cst_39 [1] : vector<10x32xf32> to vector<10xf32>
    %74 = vector.shape_cast %73 : vector<10xf32> to vector<10x1xf32>
    %cst_40 = arith.constant 3.200000e+01 : f32
    %75 = vector.broadcast %cst_40 : f32 to vector<10x1xf32>
    %76 = arith.divf %74, %75 : vector<10x1xf32>
    %77 = vector.broadcast %69 : vector<10x1xf32> to vector<10x32xf32>
    %78 = arith.subf %60, %77 : vector<10x32xf32>
    %cst_41 = arith.constant 9.99999974E-6 : f32
    %79 = vector.broadcast %cst_41 : f32 to vector<10x1xf32>
    %80 = arith.addf %76, %79 : vector<10x1xf32>
    %81 = math.rsqrt %80 : vector<10x1xf32>
    %82 = vector.broadcast %81 : vector<10x1xf32> to vector<10x32xf32>
    %83 = arith.mulf %78, %82 : vector<10x32xf32>
    %84 = vector.broadcast %64 : vector<1x32xf32> to vector<10x32xf32>
    %85 = arith.mulf %83, %84 : vector<10x32xf32>
    %86 = vector.broadcast %65 : vector<1x32xf32> to vector<10x32xf32>
    %87 = arith.addf %85, %86 : vector<10x32xf32>
    %c0_42 = arith.constant 0 : index
    %c0_43 = arith.constant 0 : index
    %88 = vector.load %arg14[%c0_42, %c0_43] : memref<32x96xf32, #tpu.memory_space<vmem>>, vector<32x96xf32>
    %cst_44 = arith.constant dense<0.000000e+00> : vector<10x96xf32>
    %89 = tpu.matmul %87, %88, %cst_44 {dimension_numbers = #tpu.dot_dimension_numbers<[1], [0], [0], [1], [0, 0, 1, 1], [], []>} : vector<10x32xf32>, vector<32x96xf32>, vector<10x96xf32> -> vector<10x96xf32>
    %90 = vector.extract_strided_slice %89 {offsets = [0, 0], sizes = [10, 32], strides = [1, 1]} : vector<10x96xf32> to vector<10x32xf32>
    %91 = vector.extract_strided_slice %89 {offsets = [0, 32], sizes = [10, 32], strides = [1, 1]} : vector<10x96xf32> to vector<10x32xf32>
    %92 = vector.extract_strided_slice %89 {offsets = [0, 64], sizes = [10, 32], strides = [1, 1]} : vector<10x96xf32> to vector<10x32xf32>
    %93 = tpu.concatenate %91, %91, %91, %91 in 0 : vector<10x32xf32>, vector<10x32xf32>, vector<10x32xf32>, vector<10x32xf32> -> vector<40x32xf32>
    %94 = arith.mulf %93, %61 : vector<40x32xf32>
    %95 = tpu.concatenate %92, %92, %92, %92 in 0 : vector<10x32xf32>, vector<10x32xf32>, vector<10x32xf32>, vector<10x32xf32> -> vector<40x32xf32>
    %96 = arith.mulf %95, %61 : vector<40x32xf32>
    %97 = tpu.transpose %94, [1, 0] : vector<40x32xf32> -> vector<32x40xf32>
    %cst_45 = arith.constant dense<0.000000e+00> : vector<10x40xf32>
    %98 = tpu.matmul %90, %97, %cst_45 {dimension_numbers = #tpu.dot_dimension_numbers<[1], [0], [0], [1], [0, 0, 1, 1], [], []>} : vector<10x32xf32>, vector<32x40xf32>, vector<10x40xf32> -> vector<10x40xf32>
    %cst_46 = arith.constant 0.353553385 : f32
    %99 = vector.broadcast %cst_46 : f32 to vector<10x40xf32>
    %100 = arith.mulf %98, %99 : vector<10x40xf32>
    %101 = arith.addf %100, %62 : vector<10x40xf32>
    %cst_47 = arith.constant dense<0xFF800000> : vector<10xf32>
    %102 = vector.multi_reduction <maximumf>, %101, %cst_47 [1] : vector<10x40xf32> to vector<10xf32>
    %103 = vector.shape_cast %102 : vector<10xf32> to vector<10x1xf32>
    %104 = vector.broadcast %103 : vector<10x1xf32> to vector<10x40xf32>
    %105 = arith.subf %101, %104 : vector<10x40xf32>
    %106 = math.exp %105 : vector<10x40xf32>
    %cst_48 = arith.constant dense<0.000000e+00> : vector<10x40xf32>
    %107 = tpu.matmul %106, %63, %cst_48 {dimension_numbers = #tpu.dot_dimension_numbers<[1], [0], [0], [1], [0, 0, 1, 1], [], []>} : vector<10x40xf32>, vector<40x40xf32>, vector<10x40xf32> -> vector<10x40xf32>
    %108 = tpu.reciprocal %107 {approx = true} : vector<10x40xf32> -> vector<10x40xf32>
    %109 = arith.mulf %106, %108 : vector<10x40xf32>
    %cst_49 = arith.constant dense<0.000000e+00> : vector<10x32xf32>
    %110 = tpu.matmul %109, %96, %cst_49 {dimension_numbers = #tpu.dot_dimension_numbers<[1], [0], [0], [1], [0, 0, 1, 1], [], []>} : vector<10x40xf32>, vector<40x32xf32>, vector<10x32xf32> -> vector<10x32xf32>
    %c0_50 = arith.constant 0 : index
    %c0_51 = arith.constant 0 : index
    %111 = vector.load %arg15[%c0_50, %c0_51] : memref<32x32xf32, #tpu.memory_space<vmem>>, vector<32x32xf32>
    %cst_52 = arith.constant dense<0.000000e+00> : vector<10x32xf32>
    %112 = tpu.matmul %110, %111, %cst_52 {dimension_numbers = #tpu.dot_dimension_numbers<[1], [0], [0], [1], [0, 0, 1, 1], [], []>} : vector<10x32xf32>, vector<32x32xf32>, vector<10x32xf32> -> vector<10x32xf32>
    %c0_53 = arith.constant 0 : index
    %c0_54 = arith.constant 0 : index
    %113 = vector.load %arg16[%c0_53, %c0_54] : memref<1x32xf32, #tpu.memory_space<vmem>>, vector<1x32xf32>
    %114 = vector.broadcast %113 : vector<1x32xf32> to vector<10x32xf32>
    %115 = arith.addf %112, %114 : vector<10x32xf32>
    %116 = arith.addf %115, %60 : vector<10x32xf32>
    %c0_55 = arith.constant 0 : index
    %c0_56 = arith.constant 0 : index
    %117 = vector.load %arg17[%c0_55, %c0_56] : memref<1x32xf32, #tpu.memory_space<vmem>>, vector<1x32xf32>
    %c0_57 = arith.constant 0 : index
    %c0_58 = arith.constant 0 : index
    %118 = vector.load %arg18[%c0_57, %c0_58] : memref<1x32xf32, #tpu.memory_space<vmem>>, vector<1x32xf32>
    %cst_59 = arith.constant dense<0.000000e+00> : vector<10xf32>
    %119 = vector.multi_reduction <add>, %116, %cst_59 [1] : vector<10x32xf32> to vector<10xf32>
    %120 = vector.shape_cast %119 : vector<10xf32> to vector<10x1xf32>
    %cst_60 = arith.constant 3.200000e+01 : f32
    %121 = vector.broadcast %cst_60 : f32 to vector<10x1xf32>
    %122 = arith.divf %120, %121 : vector<10x1xf32>
    %123 = vector.broadcast %122 : vector<10x1xf32> to vector<10x32xf32>
    %124 = arith.subf %116, %123 : vector<10x32xf32>
    %125 = arith.mulf %124, %124 : vector<10x32xf32>
    %cst_61 = arith.constant dense<0.000000e+00> : vector<10xf32>
    %126 = vector.multi_reduction <add>, %125, %cst_61 [1] : vector<10x32xf32> to vector<10xf32>
    %127 = vector.shape_cast %126 : vector<10xf32> to vector<10x1xf32>
    %cst_62 = arith.constant 3.200000e+01 : f32
    %128 = vector.broadcast %cst_62 : f32 to vector<10x1xf32>
    %129 = arith.divf %127, %128 : vector<10x1xf32>
    %130 = vector.broadcast %122 : vector<10x1xf32> to vector<10x32xf32>
    %131 = arith.subf %116, %130 : vector<10x32xf32>
    %cst_63 = arith.constant 9.99999974E-6 : f32
    %132 = vector.broadcast %cst_63 : f32 to vector<10x1xf32>
    %133 = arith.addf %129, %132 : vector<10x1xf32>
    %134 = math.rsqrt %133 : vector<10x1xf32>
    %135 = vector.broadcast %134 : vector<10x1xf32> to vector<10x32xf32>
    %136 = arith.mulf %131, %135 : vector<10x32xf32>
    %137 = vector.broadcast %117 : vector<1x32xf32> to vector<10x32xf32>
    %138 = arith.mulf %136, %137 : vector<10x32xf32>
    %139 = vector.broadcast %118 : vector<1x32xf32> to vector<10x32xf32>
    %140 = arith.addf %138, %139 : vector<10x32xf32>
    %c0_64 = arith.constant 0 : index
    %c0_65 = arith.constant 0 : index
    %141 = vector.load %arg19[%c0_64, %c0_65] : memref<32x64xf32, #tpu.memory_space<vmem>>, vector<32x64xf32>
    %cst_66 = arith.constant dense<0.000000e+00> : vector<10x64xf32>
    %142 = tpu.matmul %140, %141, %cst_66 {dimension_numbers = #tpu.dot_dimension_numbers<[1], [0], [0], [1], [0, 0, 1, 1], [], []>} : vector<10x32xf32>, vector<32x64xf32>, vector<10x64xf32> -> vector<10x64xf32>
    %c0_67 = arith.constant 0 : index
    %c0_68 = arith.constant 0 : index
    %143 = vector.load %arg20[%c0_67, %c0_68] : memref<1x64xf32, #tpu.memory_space<vmem>>, vector<1x64xf32>
    %144 = vector.broadcast %143 : vector<1x64xf32> to vector<10x64xf32>
    %145 = arith.addf %142, %144 : vector<10x64xf32>
    %cst_69 = arith.constant 5.000000e-01 : f32
    %146 = vector.broadcast %cst_69 : f32 to vector<10x64xf32>
    %147 = arith.mulf %146, %145 : vector<10x64xf32>
    %cst_70 = arith.constant 0.707106769 : f32
    %148 = vector.broadcast %cst_70 : f32 to vector<10x64xf32>
    %149 = arith.mulf %145, %148 : vector<10x64xf32>
    %150 = math.absf %149 : vector<10x64xf32>
    %cst_71 = arith.constant 0.327591091 : f32
    %151 = vector.broadcast %cst_71 : f32 to vector<10x64xf32>
    %152 = arith.mulf %151, %150 : vector<10x64xf32>
    %cst_72 = arith.constant 1.000000e+00 : f32
    %153 = vector.broadcast %cst_72 : f32 to vector<10x64xf32>
    %154 = arith.addf %153, %152 : vector<10x64xf32>
    %cst_73 = arith.constant 1.000000e+00 : f32
    %155 = vector.broadcast %cst_73 : f32 to vector<10x64xf32>
    %156 = arith.divf %155, %154 : vector<10x64xf32>
    %cst_74 = arith.constant 1.06140542 : f32
    %157 = vector.broadcast %cst_74 : f32 to vector<10x64xf32>
    %158 = arith.mulf %157, %156 : vector<10x64xf32>
    %cst_75 = arith.constant -1.45315206 : f32
    %159 = vector.broadcast %cst_75 : f32 to vector<10x64xf32>
    %160 = arith.addf %158, %159 : vector<10x64xf32>
    %161 = arith.mulf %160, %156 : vector<10x64xf32>
    %cst_76 = arith.constant 1.42141378 : f32
    %162 = vector.broadcast %cst_76 : f32 to vector<10x64xf32>
    %163 = arith.addf %161, %162 : vector<10x64xf32>
    %164 = arith.mulf %163, %156 : vector<10x64xf32>
    %cst_77 = arith.constant -0.284496725 : f32
    %165 = vector.broadcast %cst_77 : f32 to vector<10x64xf32>
    %166 = arith.addf %164, %165 : vector<10x64xf32>
    %167 = arith.mulf %166, %156 : vector<10x64xf32>
    %cst_78 = arith.constant 0.254829586 : f32
    %168 = vector.broadcast %cst_78 : f32 to vector<10x64xf32>
    %169 = arith.addf %167, %168 : vector<10x64xf32>
    %170 = arith.mulf %169, %156 : vector<10x64xf32>
    %cst_79 = arith.constant 0.000000e+00 : f32
    %171 = vector.broadcast %cst_79 : f32 to vector<10x64xf32>
    %172 = arith.subf %171, %150 : vector<10x64xf32>
    %173 = arith.mulf %172, %150 : vector<10x64xf32>
    %174 = math.exp %173 : vector<10x64xf32>
    %175 = arith.mulf %170, %174 : vector<10x64xf32>
    %cst_80 = arith.constant 1.000000e+00 : f32
    %176 = vector.broadcast %cst_80 : f32 to vector<10x64xf32>
    %177 = arith.subf %176, %175 : vector<10x64xf32>
    %cst_81 = arith.constant 0.000000e+00 : f32
    %178 = vector.broadcast %cst_81 : f32 to vector<10x64xf32>
    %179 = arith.cmpf oge, %149, %178 : vector<10x64xf32>
    %cst_82 = arith.constant 0.000000e+00 : f32
    %180 = vector.broadcast %cst_82 : f32 to vector<10x64xf32>
    %181 = arith.subf %180, %177 : vector<10x64xf32>
    %182 = arith.select %179, %177, %181 : vector<10x64xi1>, vector<10x64xf32>
    %cst_83 = arith.constant 1.000000e+00 : f32
    %183 = vector.broadcast %cst_83 : f32 to vector<10x64xf32>
    %184 = arith.addf %183, %182 : vector<10x64xf32>
    %185 = arith.mulf %147, %184 : vector<10x64xf32>
    %c0_84 = arith.constant 0 : index
    %c0_85 = arith.constant 0 : index
    %186 = vector.load %arg21[%c0_84, %c0_85] : memref<64x32xf32, #tpu.memory_space<vmem>>, vector<64x32xf32>
    %cst_86 = arith.constant dense<0.000000e+00> : vector<10x32xf32>
    %187 = tpu.matmul %185, %186, %cst_86 {dimension_numbers = #tpu.dot_dimension_numbers<[1], [0], [0], [1], [0, 0, 1, 1], [], []>} : vector<10x64xf32>, vector<64x32xf32>, vector<10x32xf32> -> vector<10x32xf32>
    %c0_87 = arith.constant 0 : index
    %c0_88 = arith.constant 0 : index
    %188 = vector.load %arg22[%c0_87, %c0_88] : memref<1x32xf32, #tpu.memory_space<vmem>>, vector<1x32xf32>
    %189 = vector.broadcast %188 : vector<1x32xf32> to vector<10x32xf32>
    %190 = arith.addf %187, %189 : vector<10x32xf32>
    %191 = arith.addf %190, %116 : vector<10x32xf32>
    %c0_89 = arith.constant 0 : index
    %c0_90 = arith.constant 0 : index
    %192 = vector.load %arg23[%c0_89, %c0_90] : memref<1x32xf32, #tpu.memory_space<vmem>>, vector<1x32xf32>
    %c0_91 = arith.constant 0 : index
    %c0_92 = arith.constant 0 : index
    %193 = vector.load %arg24[%c0_91, %c0_92] : memref<1x32xf32, #tpu.memory_space<vmem>>, vector<1x32xf32>
    %cst_93 = arith.constant dense<0.000000e+00> : vector<10xf32>
    %194 = vector.multi_reduction <add>, %191, %cst_93 [1] : vector<10x32xf32> to vector<10xf32>
    %195 = vector.shape_cast %194 : vector<10xf32> to vector<10x1xf32>
    %cst_94 = arith.constant 3.200000e+01 : f32
    %196 = vector.broadcast %cst_94 : f32 to vector<10x1xf32>
    %197 = arith.divf %195, %196 : vector<10x1xf32>
    %198 = vector.broadcast %197 : vector<10x1xf32> to vector<10x32xf32>
    %199 = arith.subf %191, %198 : vector<10x32xf32>
    %200 = arith.mulf %199, %199 : vector<10x32xf32>
    %cst_95 = arith.constant dense<0.000000e+00> : vector<10xf32>
    %201 = vector.multi_reduction <add>, %200, %cst_95 [1] : vector<10x32xf32> to vector<10xf32>
    %202 = vector.shape_cast %201 : vector<10xf32> to vector<10x1xf32>
    %cst_96 = arith.constant 3.200000e+01 : f32
    %203 = vector.broadcast %cst_96 : f32 to vector<10x1xf32>
    %204 = arith.divf %202, %203 : vector<10x1xf32>
    %205 = vector.broadcast %197 : vector<10x1xf32> to vector<10x32xf32>
    %206 = arith.subf %191, %205 : vector<10x32xf32>
    %cst_97 = arith.constant 9.99999974E-6 : f32
    %207 = vector.broadcast %cst_97 : f32 to vector<10x1xf32>
    %208 = arith.addf %204, %207 : vector<10x1xf32>
    %209 = math.rsqrt %208 : vector<10x1xf32>
    %210 = vector.broadcast %209 : vector<10x1xf32> to vector<10x32xf32>
    %211 = arith.mulf %206, %210 : vector<10x32xf32>
    %212 = vector.broadcast %192 : vector<1x32xf32> to vector<10x32xf32>
    %213 = arith.mulf %211, %212 : vector<10x32xf32>
    %214 = vector.broadcast %193 : vector<1x32xf32> to vector<10x32xf32>
    %215 = arith.addf %213, %214 : vector<10x32xf32>
    %c0_98 = arith.constant 0 : index
    %c0_99 = arith.constant 0 : index
    %216 = vector.load %arg25[%c0_98, %c0_99] : memref<32x96xf32, #tpu.memory_space<vmem>>, vector<32x96xf32>
    %cst_100 = arith.constant dense<0.000000e+00> : vector<10x96xf32>
    %217 = tpu.matmul %215, %216, %cst_100 {dimension_numbers = #tpu.dot_dimension_numbers<[1], [0], [0], [1], [0, 0, 1, 1], [], []>} : vector<10x32xf32>, vector<32x96xf32>, vector<10x96xf32> -> vector<10x96xf32>
    %218 = vector.extract_strided_slice %217 {offsets = [0, 0], sizes = [10, 32], strides = [1, 1]} : vector<10x96xf32> to vector<10x32xf32>
    %219 = vector.extract_strided_slice %217 {offsets = [0, 32], sizes = [10, 32], strides = [1, 1]} : vector<10x96xf32> to vector<10x32xf32>
    %220 = vector.extract_strided_slice %217 {offsets = [0, 64], sizes = [10, 32], strides = [1, 1]} : vector<10x96xf32> to vector<10x32xf32>
    %221 = tpu.concatenate %219, %219, %219, %219 in 0 : vector<10x32xf32>, vector<10x32xf32>, vector<10x32xf32>, vector<10x32xf32> -> vector<40x32xf32>
    %222 = arith.mulf %221, %61 : vector<40x32xf32>
    %223 = tpu.concatenate %220, %220, %220, %220 in 0 : vector<10x32xf32>, vector<10x32xf32>, vector<10x32xf32>, vector<10x32xf32> -> vector<40x32xf32>
    %224 = arith.mulf %223, %61 : vector<40x32xf32>
    %225 = tpu.transpose %222, [1, 0] : vector<40x32xf32> -> vector<32x40xf32>
    %cst_101 = arith.constant dense<0.000000e+00> : vector<10x40xf32>
    %226 = tpu.matmul %218, %225, %cst_101 {dimension_numbers = #tpu.dot_dimension_numbers<[1], [0], [0], [1], [0, 0, 1, 1], [], []>} : vector<10x32xf32>, vector<32x40xf32>, vector<10x40xf32> -> vector<10x40xf32>
    %cst_102 = arith.constant 0.353553385 : f32
    %227 = vector.broadcast %cst_102 : f32 to vector<10x40xf32>
    %228 = arith.mulf %226, %227 : vector<10x40xf32>
    %229 = arith.addf %228, %62 : vector<10x40xf32>
    %cst_103 = arith.constant dense<0xFF800000> : vector<10xf32>
    %230 = vector.multi_reduction <maximumf>, %229, %cst_103 [1] : vector<10x40xf32> to vector<10xf32>
    %231 = vector.shape_cast %230 : vector<10xf32> to vector<10x1xf32>
    %232 = vector.broadcast %231 : vector<10x1xf32> to vector<10x40xf32>
    %233 = arith.subf %229, %232 : vector<10x40xf32>
    %234 = math.exp %233 : vector<10x40xf32>
    %cst_104 = arith.constant dense<0.000000e+00> : vector<10x40xf32>
    %235 = tpu.matmul %234, %63, %cst_104 {dimension_numbers = #tpu.dot_dimension_numbers<[1], [0], [0], [1], [0, 0, 1, 1], [], []>} : vector<10x40xf32>, vector<40x40xf32>, vector<10x40xf32> -> vector<10x40xf32>
    %236 = tpu.reciprocal %235 {approx = true} : vector<10x40xf32> -> vector<10x40xf32>
    %237 = arith.mulf %234, %236 : vector<10x40xf32>
    %cst_105 = arith.constant dense<0.000000e+00> : vector<10x32xf32>
    %238 = tpu.matmul %237, %224, %cst_105 {dimension_numbers = #tpu.dot_dimension_numbers<[1], [0], [0], [1], [0, 0, 1, 1], [], []>} : vector<10x40xf32>, vector<40x32xf32>, vector<10x32xf32> -> vector<10x32xf32>
    %c0_106 = arith.constant 0 : index
    %c0_107 = arith.constant 0 : index
    %239 = vector.load %arg26[%c0_106, %c0_107] : memref<32x32xf32, #tpu.memory_space<vmem>>, vector<32x32xf32>
    %cst_108 = arith.constant dense<0.000000e+00> : vector<10x32xf32>
    %240 = tpu.matmul %238, %239, %cst_108 {dimension_numbers = #tpu.dot_dimension_numbers<[1], [0], [0], [1], [0, 0, 1, 1], [], []>} : vector<10x32xf32>, vector<32x32xf32>, vector<10x32xf32> -> vector<10x32xf32>
    %c0_109 = arith.constant 0 : index
    %c0_110 = arith.constant 0 : index
    %241 = vector.load %arg27[%c0_109, %c0_110] : memref<1x32xf32, #tpu.memory_space<vmem>>, vector<1x32xf32>
    %242 = vector.broadcast %241 : vector<1x32xf32> to vector<10x32xf32>
    %243 = arith.addf %240, %242 : vector<10x32xf32>
    %244 = arith.addf %243, %191 : vector<10x32xf32>
    %c0_111 = arith.constant 0 : index
    %c0_112 = arith.constant 0 : index
    %245 = vector.load %arg28[%c0_111, %c0_112] : memref<1x32xf32, #tpu.memory_space<vmem>>, vector<1x32xf32>
    %c0_113 = arith.constant 0 : index
    %c0_114 = arith.constant 0 : index
    %246 = vector.load %arg29[%c0_113, %c0_114] : memref<1x32xf32, #tpu.memory_space<vmem>>, vector<1x32xf32>
    %cst_115 = arith.constant dense<0.000000e+00> : vector<10xf32>
    %247 = vector.multi_reduction <add>, %244, %cst_115 [1] : vector<10x32xf32> to vector<10xf32>
    %248 = vector.shape_cast %247 : vector<10xf32> to vector<10x1xf32>
    %cst_116 = arith.constant 3.200000e+01 : f32
    %249 = vector.broadcast %cst_116 : f32 to vector<10x1xf32>
    %250 = arith.divf %248, %249 : vector<10x1xf32>
    %251 = vector.broadcast %250 : vector<10x1xf32> to vector<10x32xf32>
    %252 = arith.subf %244, %251 : vector<10x32xf32>
    %253 = arith.mulf %252, %252 : vector<10x32xf32>
    %cst_117 = arith.constant dense<0.000000e+00> : vector<10xf32>
    %254 = vector.multi_reduction <add>, %253, %cst_117 [1] : vector<10x32xf32> to vector<10xf32>
    %255 = vector.shape_cast %254 : vector<10xf32> to vector<10x1xf32>
    %cst_118 = arith.constant 3.200000e+01 : f32
    %256 = vector.broadcast %cst_118 : f32 to vector<10x1xf32>
    %257 = arith.divf %255, %256 : vector<10x1xf32>
    %258 = vector.broadcast %250 : vector<10x1xf32> to vector<10x32xf32>
    %259 = arith.subf %244, %258 : vector<10x32xf32>
    %cst_119 = arith.constant 9.99999974E-6 : f32
    %260 = vector.broadcast %cst_119 : f32 to vector<10x1xf32>
    %261 = arith.addf %257, %260 : vector<10x1xf32>
    %262 = math.rsqrt %261 : vector<10x1xf32>
    %263 = vector.broadcast %262 : vector<10x1xf32> to vector<10x32xf32>
    %264 = arith.mulf %259, %263 : vector<10x32xf32>
    %265 = vector.broadcast %245 : vector<1x32xf32> to vector<10x32xf32>
    %266 = arith.mulf %264, %265 : vector<10x32xf32>
    %267 = vector.broadcast %246 : vector<1x32xf32> to vector<10x32xf32>
    %268 = arith.addf %266, %267 : vector<10x32xf32>
    %c0_120 = arith.constant 0 : index
    %c0_121 = arith.constant 0 : index
    %269 = vector.load %arg30[%c0_120, %c0_121] : memref<32x64xf32, #tpu.memory_space<vmem>>, vector<32x64xf32>
    %cst_122 = arith.constant dense<0.000000e+00> : vector<10x64xf32>
    %270 = tpu.matmul %268, %269, %cst_122 {dimension_numbers = #tpu.dot_dimension_numbers<[1], [0], [0], [1], [0, 0, 1, 1], [], []>} : vector<10x32xf32>, vector<32x64xf32>, vector<10x64xf32> -> vector<10x64xf32>
    %c0_123 = arith.constant 0 : index
    %c0_124 = arith.constant 0 : index
    %271 = vector.load %arg31[%c0_123, %c0_124] : memref<1x64xf32, #tpu.memory_space<vmem>>, vector<1x64xf32>
    %272 = vector.broadcast %271 : vector<1x64xf32> to vector<10x64xf32>
    %273 = arith.addf %270, %272 : vector<10x64xf32>
    %cst_125 = arith.constant 5.000000e-01 : f32
    %274 = vector.broadcast %cst_125 : f32 to vector<10x64xf32>
    %275 = arith.mulf %274, %273 : vector<10x64xf32>
    %cst_126 = arith.constant 0.707106769 : f32
    %276 = vector.broadcast %cst_126 : f32 to vector<10x64xf32>
    %277 = arith.mulf %273, %276 : vector<10x64xf32>
    %278 = math.absf %277 : vector<10x64xf32>
    %cst_127 = arith.constant 0.327591091 : f32
    %279 = vector.broadcast %cst_127 : f32 to vector<10x64xf32>
    %280 = arith.mulf %279, %278 : vector<10x64xf32>
    %cst_128 = arith.constant 1.000000e+00 : f32
    %281 = vector.broadcast %cst_128 : f32 to vector<10x64xf32>
    %282 = arith.addf %281, %280 : vector<10x64xf32>
    %cst_129 = arith.constant 1.000000e+00 : f32
    %283 = vector.broadcast %cst_129 : f32 to vector<10x64xf32>
    %284 = arith.divf %283, %282 : vector<10x64xf32>
    %cst_130 = arith.constant 1.06140542 : f32
    %285 = vector.broadcast %cst_130 : f32 to vector<10x64xf32>
    %286 = arith.mulf %285, %284 : vector<10x64xf32>
    %cst_131 = arith.constant -1.45315206 : f32
    %287 = vector.broadcast %cst_131 : f32 to vector<10x64xf32>
    %288 = arith.addf %286, %287 : vector<10x64xf32>
    %289 = arith.mulf %288, %284 : vector<10x64xf32>
    %cst_132 = arith.constant 1.42141378 : f32
    %290 = vector.broadcast %cst_132 : f32 to vector<10x64xf32>
    %291 = arith.addf %289, %290 : vector<10x64xf32>
    %292 = arith.mulf %291, %284 : vector<10x64xf32>
    %cst_133 = arith.constant -0.284496725 : f32
    %293 = vector.broadcast %cst_133 : f32 to vector<10x64xf32>
    %294 = arith.addf %292, %293 : vector<10x64xf32>
    %295 = arith.mulf %294, %284 : vector<10x64xf32>
    %cst_134 = arith.constant 0.254829586 : f32
    %296 = vector.broadcast %cst_134 : f32 to vector<10x64xf32>
    %297 = arith.addf %295, %296 : vector<10x64xf32>
    %298 = arith.mulf %297, %284 : vector<10x64xf32>
    %cst_135 = arith.constant 0.000000e+00 : f32
    %299 = vector.broadcast %cst_135 : f32 to vector<10x64xf32>
    %300 = arith.subf %299, %278 : vector<10x64xf32>
    %301 = arith.mulf %300, %278 : vector<10x64xf32>
    %302 = math.exp %301 : vector<10x64xf32>
    %303 = arith.mulf %298, %302 : vector<10x64xf32>
    %cst_136 = arith.constant 1.000000e+00 : f32
    %304 = vector.broadcast %cst_136 : f32 to vector<10x64xf32>
    %305 = arith.subf %304, %303 : vector<10x64xf32>
    %cst_137 = arith.constant 0.000000e+00 : f32
    %306 = vector.broadcast %cst_137 : f32 to vector<10x64xf32>
    %307 = arith.cmpf oge, %277, %306 : vector<10x64xf32>
    %cst_138 = arith.constant 0.000000e+00 : f32
    %308 = vector.broadcast %cst_138 : f32 to vector<10x64xf32>
    %309 = arith.subf %308, %305 : vector<10x64xf32>
    %310 = arith.select %307, %305, %309 : vector<10x64xi1>, vector<10x64xf32>
    %cst_139 = arith.constant 1.000000e+00 : f32
    %311 = vector.broadcast %cst_139 : f32 to vector<10x64xf32>
    %312 = arith.addf %311, %310 : vector<10x64xf32>
    %313 = arith.mulf %275, %312 : vector<10x64xf32>
    %c0_140 = arith.constant 0 : index
    %c0_141 = arith.constant 0 : index
    %314 = vector.load %arg32[%c0_140, %c0_141] : memref<64x32xf32, #tpu.memory_space<vmem>>, vector<64x32xf32>
    %cst_142 = arith.constant dense<0.000000e+00> : vector<10x32xf32>
    %315 = tpu.matmul %313, %314, %cst_142 {dimension_numbers = #tpu.dot_dimension_numbers<[1], [0], [0], [1], [0, 0, 1, 1], [], []>} : vector<10x64xf32>, vector<64x32xf32>, vector<10x32xf32> -> vector<10x32xf32>
    %c0_143 = arith.constant 0 : index
    %c0_144 = arith.constant 0 : index
    %316 = vector.load %arg33[%c0_143, %c0_144] : memref<1x32xf32, #tpu.memory_space<vmem>>, vector<1x32xf32>
    %317 = vector.broadcast %316 : vector<1x32xf32> to vector<10x32xf32>
    %318 = arith.addf %315, %317 : vector<10x32xf32>
    %319 = arith.addf %318, %244 : vector<10x32xf32>
    %c0_145 = arith.constant 0 : index
    %c0_146 = arith.constant 0 : index
    %320 = vector.load %arg34[%c0_145, %c0_146] : memref<1x32xf32, #tpu.memory_space<vmem>>, vector<1x32xf32>
    %c0_147 = arith.constant 0 : index
    %c0_148 = arith.constant 0 : index
    %321 = vector.load %arg35[%c0_147, %c0_148] : memref<1x32xf32, #tpu.memory_space<vmem>>, vector<1x32xf32>
    %cst_149 = arith.constant dense<0.000000e+00> : vector<10xf32>
    %322 = vector.multi_reduction <add>, %319, %cst_149 [1] : vector<10x32xf32> to vector<10xf32>
    %323 = vector.shape_cast %322 : vector<10xf32> to vector<10x1xf32>
    %cst_150 = arith.constant 3.200000e+01 : f32
    %324 = vector.broadcast %cst_150 : f32 to vector<10x1xf32>
    %325 = arith.divf %323, %324 : vector<10x1xf32>
    %326 = vector.broadcast %325 : vector<10x1xf32> to vector<10x32xf32>
    %327 = arith.subf %319, %326 : vector<10x32xf32>
    %328 = arith.mulf %327, %327 : vector<10x32xf32>
    %cst_151 = arith.constant dense<0.000000e+00> : vector<10xf32>
    %329 = vector.multi_reduction <add>, %328, %cst_151 [1] : vector<10x32xf32> to vector<10xf32>
    %330 = vector.shape_cast %329 : vector<10xf32> to vector<10x1xf32>
    %cst_152 = arith.constant 3.200000e+01 : f32
    %331 = vector.broadcast %cst_152 : f32 to vector<10x1xf32>
    %332 = arith.divf %330, %331 : vector<10x1xf32>
    %333 = vector.broadcast %325 : vector<10x1xf32> to vector<10x32xf32>
    %334 = arith.subf %319, %333 : vector<10x32xf32>
    %cst_153 = arith.constant 9.99999974E-6 : f32
    %335 = vector.broadcast %cst_153 : f32 to vector<10x1xf32>
    %336 = arith.addf %332, %335 : vector<10x1xf32>
    %337 = math.rsqrt %336 : vector<10x1xf32>
    %338 = vector.broadcast %337 : vector<10x1xf32> to vector<10x32xf32>
    %339 = arith.mulf %334, %338 : vector<10x32xf32>
    %340 = vector.broadcast %320 : vector<1x32xf32> to vector<10x32xf32>
    %341 = arith.mulf %339, %340 : vector<10x32xf32>
    %342 = vector.broadcast %321 : vector<1x32xf32> to vector<10x32xf32>
    %343 = arith.addf %341, %342 : vector<10x32xf32>
    %344 = vector.extract_strided_slice %343 {offsets = [0, 0], sizes = [1, 32], strides = [1, 1]} : vector<10x32xf32> to vector<1x32xf32>
    %345 = vector.extract_strided_slice %343 {offsets = [5, 0], sizes = [1, 32], strides = [1, 1]} : vector<10x32xf32> to vector<1x32xf32>
    %346 = tpu.concatenate %344, %345 in 0 : vector<1x32xf32>, vector<1x32xf32> -> vector<2x32xf32>
    %c0_154 = arith.constant 0 : index
    %c0_155 = arith.constant 0 : index
    %347 = vector.load %arg36[%c0_154, %c0_155] : memref<32x10xf32, #tpu.memory_space<vmem>>, vector<32x10xf32>
    %cst_156 = arith.constant dense<0.000000e+00> : vector<2x10xf32>
    %348 = tpu.matmul %346, %347, %cst_156 {dimension_numbers = #tpu.dot_dimension_numbers<[1], [0], [0], [1], [0, 0, 1, 1], [], []>} : vector<2x32xf32>, vector<32x10xf32>, vector<2x10xf32> -> vector<2x10xf32>
    %c0_157 = arith.constant 0 : index
    %c0_158 = arith.constant 0 : index
    %349 = vector.load %arg37[%c0_157, %c0_158] : memref<1x10xf32, #tpu.memory_space<vmem>>, vector<1x10xf32>
    %350 = vector.broadcast %349 : vector<1x10xf32> to vector<2x10xf32>
    %351 = arith.addf %348, %350 : vector<2x10xf32>
    %c0_159 = arith.constant 0 : index
    %c0_160 = arith.constant 0 : index
    %352 = vector.load %arg38[%c0_159, %c0_160] : memref<2x10xf32, #tpu.memory_space<vmem>>, vector<2x10xf32>
    tpu.vector_store %arg38[%c0_159, %c0_160], %351 {strides = array<i32>} : memref<2x10xf32, #tpu.memory_space<vmem>>, vector<2x10xf32>,
    return
  }
}

</mosaic_0001>

<llo_original>
// kernel: vit_forward.1
$region0: #{vit_forward.1}
  #allocation0 [shape = 'u32[]', space=smem, size = 0x4, offset = 0x4, fixed_abs, tag = 'smem constant byte address 0x4 - core index']
  #allocation1 [shape = 'u32[144,128]{1,0:T(1,128)}', space=vmem, size = 0x12000, scoped, tag = 'internal scratch']
  %s0 = inlined_call_operand.smem [shape: u32[39], index: -1, kind: input, shape index: {}]
  %s1 = sld [smem:[%s0]]
  %s2 = scalar_lea.smem %s0, 1
  %s3 = sld [smem:[%s2]]
  %s4 = scalar_lea.smem %s0, 2
  %s5 = sld [smem:[%s4]]
  %s6 = scalar_lea.smem %s0, 3
  %s7 = sld [smem:[%s6]]
  %s8 = scalar_lea.smem %s0, 4
  %s9 = sld [smem:[%s8]]
  %s10 = scalar_lea.smem %s0, 5
  %s11 = sld [smem:[%s10]]
  %s12 = scalar_lea.smem %s0, 6
  %s13 = sld [smem:[%s12]]
  %s14 = scalar_lea.smem %s0, 7
  %s15 = sld [smem:[%s14]]
  %s16 = scalar_lea.smem %s0, 8
  %s17 = sld [smem:[%s16]]
  %s18 = scalar_lea.smem %s0, 9
  %s19 = sld [smem:[%s18]]
  %s20 = scalar_lea.smem %s0, 10
  %s21 = sld [smem:[%s20]]
  %s22 = scalar_lea.smem %s0, 11
  %s23 = sld [smem:[%s22]]
  %s24 = scalar_lea.smem %s0, 12
  %s25 = sld [smem:[%s24]]
  %s26 = scalar_lea.smem %s0, 13
  %s27 = sld [smem:[%s26]]
  %s28 = scalar_lea.smem %s0, 14
  %s29 = sld [smem:[%s28]]
  %s30 = scalar_lea.smem %s0, 15
  %s31 = sld [smem:[%s30]]
  %s32 = scalar_lea.smem %s0, 16
  %s33 = sld [smem:[%s32]]
  %s34 = scalar_lea.smem %s0, 17
  %s35 = sld [smem:[%s34]]
  %s36 = scalar_lea.smem %s0, 18
  %s37 = sld [smem:[%s36]]
  %s38 = scalar_lea.smem %s0, 19
  %s39 = sld [smem:[%s38]]
  %s40 = scalar_lea.smem %s0, 20
  %s41 = sld [smem:[%s40]]
  %s42 = scalar_lea.smem %s0, 21
  %s43 = sld [smem:[%s42]]
  %s44 = scalar_lea.smem %s0, 22
  %s45 = sld [smem:[%s44]]
  %s46 = scalar_lea.smem %s0, 23
  %s47 = sld [smem:[%s46]]
  %s48 = scalar_lea.smem %s0, 24
  %s49 = sld [smem:[%s48]]
  %s50 = scalar_lea.smem %s0, 25
  %s51 = sld [smem:[%s50]]
  %s52 = scalar_lea.smem %s0, 26
  %s53 = sld [smem:[%s52]]
  %s54 = scalar_lea.smem %s0, 27
  %s55 = sld [smem:[%s54]]
  %s56 = scalar_lea.smem %s0, 28
  %s57 = sld [smem:[%s56]]
  %s58 = scalar_lea.smem %s0, 29
  %s59 = sld [smem:[%s58]]
  %s60 = scalar_lea.smem %s0, 30
  %s61 = sld [smem:[%s60]]
  %s62 = scalar_lea.smem %s0, 31
  %s63 = sld [smem:[%s62]]
  %s64 = scalar_lea.smem %s0, 32
  %s65 = sld [smem:[%s64]]
  %s66 = scalar_lea.smem %s0, 33
  %s67 = sld [smem:[%s66]]
  %s68 = scalar_lea.smem %s0, 34
  %s69 = sld [smem:[%s68]]
  %s70 = scalar_lea.smem %s0, 35
  %s71 = sld [smem:[%s70]]
  %s72 = scalar_lea.smem %s0, 36
  %s73 = sld [smem:[%s72]]
  %s74 = scalar_lea.smem %s0, 37
  %s75 = sld [smem:[%s74]]
  %s76 = scalar_lea.smem %s0, 38
  %s77 = sld [smem:[%s76]]
  %s78 = sld [smem:[#allocation0]]
  $region162: #{vit_forward.1} parent=0
    _
  %s80 = ssub.s32 1, %s78
  %s81 = scalar_select 0, %s80, %s78
  $region1: #{vit_forward.1} parent=0
    #allocation2 [shape = 'u8[1024]{0}', space=vmem, size = 0x400, scoped, tag = 'output window, operand 0, single buffered']
    #allocation3 [shape = 's32[1]{0}', space=sflag, size = 0x4, scoped, tag = 'scoped memory for vit_forward.1']
    %82 = vsyncpa [#allocation3], 0
    // Predicated region
    $region2: #{vit_forward.1} parent=1 // pred_check
      _
    $region3: #{vit_forward.1} parent=1 // pred_check_branch
      %84 = sbr.rel (0) target = $region5
    $region4: #{vit_forward.1} parent=1 // pred_region
      _
    $region5: #{vit_forward.1} parent=1 // pred_fallthru
      _
    // Predicated region
    $region6: #{vit_forward.1} parent=1 // pred_check
      _
    $region7: #{vit_forward.1} parent=1 // pred_check_branch
      %86 = sbr.rel (0) target = $region9
    $region8: #{vit_forward.1} parent=1 // pred_region
      _
    $region9: #{vit_forward.1} parent=1 // pred_fallthru
      _
    // Predicated region
    $region10: #{vit_forward.1} parent=1 // pred_check
      _
    $region11: #{vit_forward.1} parent=1 // pred_check_branch
      %88 = sbr.rel (0) target = $region13
    $region12: #{vit_forward.1} parent=1 // pred_region
      _
    $region13: #{vit_forward.1} parent=1 // pred_fallthru
      _
    // Predicated region
    $region14: #{vit_forward.1} parent=1 // pred_check
      _
    $region15: #{vit_forward.1} parent=1 // pred_check_branch
      %90 = sbr.rel (0) target = $region17
    $region16: #{vit_forward.1} parent=1 // pred_region
      _
    $region17: #{vit_forward.1} parent=1 // pred_fallthru
      _
    // Predicated region
    $region18: #{vit_forward.1} parent=1 // pred_check
      _
    $region19: #{vit_forward.1} parent=1 // pred_check_branch
      %92 = sbr.rel (0) target = $region21
    $region20: #{vit_forward.1} parent=1 // pred_region
      _
    $region21: #{vit_forward.1} parent=1 // pred_fallthru
      _
    // Predicated region
    $region22: #{vit_forward.1} parent=1 // pred_check
      _
    $region23: #{vit_forward.1} parent=1 // pred_check_branch
      %94 = sbr.rel (0) target = $region25
    $region24: #{vit_forward.1} parent=1 // pred_region
      _
    $region25: #{vit_forward.1} parent=1 // pred_fallthru
      _
    // Predicated region
    $region26: #{vit_forward.1} parent=1 // pred_check
      _
    $region27: #{vit_forward.1} parent=1 // pred_check_branch
      %96 = sbr.rel (0) target = $region29
    $region28: #{vit_forward.1} parent=1 // pred_region
      _
    $region29: #{vit_forward.1} parent=1 // pred_fallthru
      _
    // Predicated region
    $region30: #{vit_forward.1} parent=1 // pred_check
      _
    $region31: #{vit_forward.1} parent=1 // pred_check_branch
      %98 = sbr.rel (0) target = $region33
    $region32: #{vit_forward.1} parent=1 // pred_region
      _
    $region33: #{vit_forward.1} parent=1 // pred_fallthru
      _
    // Predicated region
    $region34: #{vit_forward.1} parent=1 // pred_check
      _
    $region35: #{vit_forward.1} parent=1 // pred_check_branch
      %100 = sbr.rel (0) target = $region37
    $region36: #{vit_forward.1} parent=1 // pred_region
      _
    $region37: #{vit_forward.1} parent=1 // pred_fallthru
      _
    // Predicated region
    $region38: #{vit_forward.1} parent=1 // pred_check
      _
    $region39: #{vit_forward.1} parent=1 // pred_check_branch
      %102 = sbr.rel (0) target = $region41
    $region40: #{vit_forward.1} parent=1 // pred_region
      _
    $region41: #{vit_forward.1} parent=1 // pred_fallthru
      _
    // Predicated region
    $region42: #{vit_forward.1} parent=1 // pred_check
      _
    $region43: #{vit_forward.1} parent=1 // pred_check_branch
      %104 = sbr.rel (0) target = $region45
    $region44: #{vit_forward.1} parent=1 // pred_region
      _
    $region45: #{vit_forward.1} parent=1 // pred_fallthru
      _
    // Predicated region
    $region46: #{vit_forward.1} parent=1 // pred_check
      _
    $region47: #{vit_forward.1} parent=1 // pred_check_branch
      %106 = sbr.rel (0) target = $region49
    $region48: #{vit_forward.1} parent=1 // pred_region
      _
    $region49: #{vit_forward.1} parent=1 // pred_fallthru
      _
    // Predicated region
    $region50: #{vit_forward.1} parent=1 // pred_check
      _
    $region51: #{vit_forward.1} parent=1 // pred_check_branch
      %108 = sbr.rel (0) target = $region53
    $region52: #{vit_forward.1} parent=1 // pred_region
      _
    $region53: #{vit_forward.1} parent=1 // pred_fallthru
      _
    // Predicated region
    $region54: #{vit_forward.1} parent=1 // pred_check
      _
    $region55: #{vit_forward.1} parent=1 // pred_check_branch
      %110 = sbr.rel (0) target = $region57
    $region56: #{vit_forward.1} parent=1 // pred_region
      _
    $region57: #{vit_forward.1} parent=1 // pred_fallthru
      _
    // Predicated region
    $region58: #{vit_forward.1} parent=1 // pred_check
      _
    $region59: #{vit_forward.1} parent=1 // pred_check_branch
      %112 = sbr.rel (0) target = $region61
    $region60: #{vit_forward.1} parent=1 // pred_region
      _
    $region61: #{vit_forward.1} parent=1 // pred_fallthru
      _
    // Predicated region
    $region62: #{vit_forward.1} parent=1 // pred_check
      _
    $region63: #{vit_forward.1} parent=1 // pred_check_branch
      %114 = sbr.rel (0) target = $region65
    $region64: #{vit_forward.1} parent=1 // pred_region
      _
    $region65: #{vit_forward.1} parent=1 // pred_fallthru
      _
    // Predicated region
    $region66: #{vit_forward.1} parent=1 // pred_check
      _
    $region67: #{vit_forward.1} parent=1 // pred_check_branch
      %116 = sbr.rel (0) target = $region69
    $region68: #{vit_forward.1} parent=1 // pred_region
      _
    $region69: #{vit_forward.1} parent=1 // pred_fallthru
      _
    // Predicated region
    $region70: #{vit_forward.1} parent=1 // pred_check
      _
    $region71: #{vit_forward.1} parent=1 // pred_check_branch
      %118 = sbr.rel (0) target = $region73
    $region72: #{vit_forward.1} parent=1 // pred_region
      _
    $region73: #{vit_forward.1} parent=1 // pred_fallthru
      _
    // Predicated region
    $region74: #{vit_forward.1} parent=1 // pred_check
      _
    $region75: #{vit_forward.1} parent=1 // pred_check_branch
      %120 = sbr.rel (0) target = $region77
    $region76: #{vit_forward.1} parent=1 // pred_region
      _
    $region77: #{vit_forward.1} parent=1 // pred_fallthru
      _
    // Predicated region
    $region78: #{vit_forward.1} parent=1 // pred_check
      _
    $region79: #{vit_forward.1} parent=1 // pred_check_branch
      %122 = sbr.rel (0) target = $region81
    $region80: #{vit_forward.1} parent=1 // pred_region
      _
    $region81: #{vit_forward.1} parent=1 // pred_fallthru
      _
    // Predicated region
    $region82: #{vit_forward.1} parent=1 // pred_check
      _
    $region83: #{vit_forward.1} parent=1 // pred_check_branch
      %124 = sbr.rel (0) target = $region85
    $region84: #{vit_forward.1} parent=1 // pred_region
      _
    $region85: #{vit_forward.1} parent=1 // pred_fallthru
      _
    // Predicated region
    $region86: #{vit_forward.1} parent=1 // pred_check
      _
    $region87: #{vit_forward.1} parent=1 // pred_check_branch
      %126 = sbr.rel (0) target = $region89
    $region88: #{vit_forward.1} parent=1 // pred_region
      _
    $region89: #{vit_forward.1} parent=1 // pred_fallthru
      _
    // Predicated region
    $region90: #{vit_forward.1} parent=1 // pred_check
      _
    $region91: #{vit_forward.1} parent=1 // pred_check_branch
      %128 = sbr.rel (0) target = $region93
    $region92: #{vit_forward.1} parent=1 // pred_region
      _
    $region93: #{vit_forward.1} parent=1 // pred_fallthru
      _
    // Predicated region
    $region94: #{vit_forward.1} parent=1 // pred_check
      _
    $region95: #{vit_forward.1} parent=1 // pred_check_branch
      %130 = sbr.rel (0) target = $region97
    $region96: #{vit_forward.1} parent=1 // pred_region
      _
    $region97: #{vit_forward.1} parent=1 // pred_fallthru
      _
    // Predicated region
    $region98: #{vit_forward.1} parent=1 // pred_check
      _
    $region99: #{vit_forward.1} parent=1 // pred_check_branch
      %132 = sbr.rel (0) target = $region101
    $region100: #{vit_forward.1} parent=1 // pred_region
      _
    $region101: #{vit_forward.1} parent=1 // pred_fallthru
      _
    // Predicated region
    $region102: #{vit_forward.1} parent=1 // pred_check
      _
    $region103: #{vit_forward.1} parent=1 // pred_check_branch
      %134 = sbr.rel (0) target = $region105
    $region104: #{vit_forward.1} parent=1 // pred_region
      _
    $region105: #{vit_forward.1} parent=1 // pred_fallthru
      _
    // Predicated region
    $region106: #{vit_forward.1} parent=1 // pred_check
      _
    $region107: #{vit_forward.1} parent=1 // pred_check_branch
      %136 = sbr.rel (0) target = $region109
    $region108: #{vit_forward.1} parent=1 // pred_region
      _
    $region109: #{vit_forward.1} parent=1 // pred_fallthru
      _
    // Predicated region
    $region110: #{vit_forward.1} parent=1 // pred_check
      _
    $region111: #{vit_forward.1} parent=1 // pred_check_branch
      %138 = sbr.rel (0) target = $region113
    $region112: #{vit_forward.1} parent=1 // pred_region
      _
    $region113: #{vit_forward.1} parent=1 // pred_fallthru
      _
    // Predicated region
    $region114: #{vit_forward.1} parent=1 // pred_check
      _
    $region115: #{vit_forward.1} parent=1 // pred_check_branch
      %140 = sbr.rel (0) target = $region117
    $region116: #{vit_forward.1} parent=1 // pred_region
      _
    $region117: #{vit_forward.1} parent=1 // pred_fallthru
      _
    // Predicated region
    $region118: #{vit_forward.1} parent=1 // pred_check
      _
    $region119: #{vit_forward.1} parent=1 // pred_check_branch
      %142 = sbr.rel (0) target = $region121
    $region120: #{vit_forward.1} parent=1 // pred_region
      _
    $region121: #{vit_forward.1} parent=1 // pred_fallthru
      _
    // Predicated region
    $region122: #{vit_forward.1} parent=1 // pred_check
      _
    $region123: #{vit_forward.1} parent=1 // pred_check_branch
      %144 = sbr.rel (0) target = $region125
    $region124: #{vit_forward.1} parent=1 // pred_region
      _
    $region125: #{vit_forward.1} parent=1 // pred_fallthru
      _
    // Predicated region
    $region126: #{vit_forward.1} parent=1 // pred_check
      _
    $region127: #{vit_forward.1} parent=1 // pred_check_branch
      %146 = sbr.rel (0) target = $region129
    $region128: #{vit_forward.1} parent=1 // pred_region
      _
    $region129: #{vit_forward.1} parent=1 // pred_fallthru
      _
    // Predicated region
    $region130: #{vit_forward.1} parent=1 // pred_check
      _
    $region131: #{vit_forward.1} parent=1 // pred_check_branch
      %148 = sbr.rel (0) target = $region133
    $region132: #{vit_forward.1} parent=1 // pred_region
      _
    $region133: #{vit_forward.1} parent=1 // pred_fallthru
      _
    // Predicated region
    $region134: #{vit_forward.1} parent=1 // pred_check
      _
    $region135: #{vit_forward.1} parent=1 // pred_check_branch
      %150 = sbr.rel (0) target = $region137
    $region136: #{vit_forward.1} parent=1 // pred_region
      _
    $region137: #{vit_forward.1} parent=1 // pred_fallthru
      _
    // Predicated region
    $region138: #{vit_forward.1} parent=1 // pred_check
      _
    $region139: #{vit_forward.1} parent=1 // pred_check_branch
      %152 = sbr.rel (0) target = $region141
    $region140: #{vit_forward.1} parent=1 // pred_region
      _
    $region141: #{vit_forward.1} parent=1 // pred_fallthru
      _
    // Predicated region
    $region142: #{vit_forward.1} parent=1 // pred_check
      _
    $region143: #{vit_forward.1} parent=1 // pred_check_branch
      %154 = sbr.rel (0) target = $region145
    $region144: #{vit_forward.1} parent=1 // pred_region
      _
    $region145: #{vit_forward.1} parent=1 // pred_fallthru
      _
    // Predicated region
    $region146: #{vit_forward.1} parent=1 // pred_check
      _
    $region147: #{vit_forward.1} parent=1 // pred_check_branch
      %156 = sbr.rel (0) target = $region149
    $region148: #{vit_forward.1} parent=1 // pred_region
      _
    $region149: #{vit_forward.1} parent=1 // pred_fallthru
      _
    // Predicated region
    $region150: #{vit_forward.1} parent=1 // pred_check
      _
    $region151: #{vit_forward.1} parent=1 // pred_check_branch
      %158 = sbr.rel (0) target = $region153
    $region152: #{vit_forward.1} parent=1 // pred_region
      _
    $region153: #{vit_forward.1} parent=1 // pred_fallthru
      _
    %v159 = vld [vmem:[%s1] sm:$0xff]
    %v160 = vld [vmem:[%s1 + $0x8] sm:$0xff]
    %v161 = vld [vmem:[%s9] sm:$0x3]
    %v162 = vld [vmem:[%s11] sm:$0x3]
    %v163 = vadd.f32 %v159, %v160
    %164 = vadd.xlane.f32.xlu0 %v163
    %v165 = vpop.xlane.xlu0 %164
    %v166 = vrcp.pop 256.0
    %v167 = vmul.f32 %v165, %v166
    %v168 = vsub.f32 %v159, %v167
    %v169 = vsub.f32 %v160, %v167
    %v170 = vmul.f32 %v168, %v168
    %v171 = vmul.f32 %v169, %v169
    %v172 = vadd.f32 %v170, %v171
    %173 = vadd.xlane.f32.xlu0 %v172
    %v174 = vpop.xlane.xlu0 %173
    %v175 = vmul.f32 %v174, %v166
    %v176 = vadd.f32 %v175, 1e-05
    %v177 = vrsqrt.pop %v176
    %v178 = vmul.f32 %v168, %v177
    %v179 = vmul.f32 %v169, %v177
    %v181 = vlaneseq
    %v182 = vshrl.u32 %v181, 7
    %v183 = vsub.s32 0, %v182
    %v184 = vrot.slane %v161, %v183
    %v185 = vlaneseq
    %v186 = vshrl.u32 %v185, 7
    %v187 = vsub.s32 1, %v186
    %v188 = vrot.slane %v161, %v187
    %v191 = vmul.f32 %v178, %v184
    %v192 = vmul.f32 %v179, %v188
    %v194 = vlaneseq
    %v195 = vshrl.u32 %v194, 7
    %v196 = vsub.s32 0, %v195
    %v197 = vrot.slane %v162, %v196
    %v198 = vlaneseq
    %v199 = vshrl.u32 %v198, 7
    %v200 = vsub.s32 1, %v199
    %v201 = vrot.slane %v162, %v200
    %v204 = vadd.f32 %v191, %v197
    %v205 = vadd.f32 %v192, %v201
    %v206 = vld [vmem:[%s13] sm:$0xff]
    %v207 = vld [vmem:[%s13 + $0x8] sm:$0xff]
    %v208 = vld [vmem:[%s13 + $0x10] sm:$0xff]
    %v209 = vld [vmem:[%s13 + $0x18] sm:$0xff]
    %v210 = vld [vmem:[%s13 + $0x20] sm:$0xff]
    %v211 = vld [vmem:[%s13 + $0x28] sm:$0xff]
    %v212 = vld [vmem:[%s13 + $0x30] sm:$0xff]
    %v213 = vld [vmem:[%s13 + $0x38] sm:$0xff]
    %v214 = vld [vmem:[%s13 + $0x40] sm:$0xff]
    %v215 = vld [vmem:[%s13 + $0x48] sm:$0xff]
    %v216 = vld [vmem:[%s13 + $0x50] sm:$0xff]
    %v217 = vld [vmem:[%s13 + $0x58] sm:$0xff]
    %v218 = vld [vmem:[%s13 + $0x60] sm:$0xff]
    %v219 = vld [vmem:[%s13 + $0x68] sm:$0xff]
    %v220 = vld [vmem:[%s13 + $0x70] sm:$0xff]
    %v221 = vld [vmem:[%s13 + $0x78] sm:$0xff]
    %v222 = vld [vmem:[%s13 + $0x80] sm:$0xff]
    %v223 = vld [vmem:[%s13 + $0x88] sm:$0xff]
    %v224 = vld [vmem:[%s13 + $0x90] sm:$0xff]
    %v225 = vld [vmem:[%s13 + $0x98] sm:$0xff]
    %v226 = vld [vmem:[%s13 + $0xa0] sm:$0xff]
    %v227 = vld [vmem:[%s13 + $0xa8] sm:$0xff]
    %v228 = vld [vmem:[%s13 + $0xb0] sm:$0xff]
    %v229 = vld [vmem:[%s13 + $0xb8] sm:$0xff]
    %v230 = vld [vmem:[%s13 + $0xc0] sm:$0xff]
    %v231 = vld [vmem:[%s13 + $0xc8] sm:$0xff]
    %v232 = vld [vmem:[%s13 + $0xd0] sm:$0xff]
    %v233 = vld [vmem:[%s13 + $0xd8] sm:$0xff]
    %v234 = vld [vmem:[%s13 + $0xe0] sm:$0xff]
    %v235 = vld [vmem:[%s13 + $0xe8] sm:$0xff]
    %v236 = vld [vmem:[%s13 + $0xf0] sm:$0xff]
    %v237 = vld [vmem:[%s13 + $0xf8] sm:$0xff]
    %v238 = vld [vmem:[%s15] sm:$0x1]
    %v240 = vlaneseq
    %v241 = vshrl.u32 %v240, 7
    %v242 = vsub.s32 0, %v241
    %v243 = vrot.slane %v238, %v242
    %245 = vmatprep.subr.mxu0 0.0
    %246 = vmatpush1.msra.mxu0 %v206
    %247 = vmatprep.subr.mxu0 0.0
    %248 = vmatpush1.msra.mxu0 %v207
    %249 = vmatprep.subr.mxu0 0.0
    %250 = vmatpush1.msra.mxu0 %v208
    %251 = vmatprep.subr.mxu0 0.0
    %252 = vmatpush1.msra.mxu0 %v209
    %253 = vmatprep.subr.mxu0 0.0
    %254 = vmatpush1.msra.mxu0 %v210
    %255 = vmatprep.subr.mxu0 0.0
    %256 = vmatpush1.msra.mxu0 %v211
    %257 = vmatprep.subr.mxu0 0.0
    %258 = vmatpush1.msra.mxu0 %v212
    %259 = vmatprep.subr.mxu0 0.0
    %260 = vmatpush1.msra.mxu0 %v213
    %261 = vmatprep.subr.mxu0 0.0
    %262 = vmatpush1.msra.mxu0 %v214
    %263 = vmatprep.subr.mxu0 0.0
    %264 = vmatpush1.msra.mxu0 %v215
    %265 = vmatprep.subr.mxu0 0.0
    %266 = vmatpush1.msra.mxu0 %v216
    %267 = vmatprep.subr.mxu0 0.0
    %268 = vmatpush1.msra.mxu0 %v217
    %269 = vmatprep.subr.mxu0 0.0
    %270 = vmatpush1.msra.mxu0 %v218
    %271 = vmatprep.subr.mxu0 0.0
    %272 = vmatpush1.msra.mxu0 %v219
    %273 = vmatprep.subr.mxu0 0.0
    %274 = vmatpush1.msra.mxu0 %v220
    %275 = vmatprep.subr.mxu0 0.0
    %276 = vmatpush1.msra.mxu0 %v221
    %277 = vmatprep.subr.mxu0 0.0
    %278 = vmatpush1.msra.mxu0 %v222
    %279 = vmatprep.subr.mxu0 0.0
    %280 = vmatpush1.msra.mxu0 %v223
    %281 = vmatprep.subr.mxu0 0.0
    %282 = vmatpush1.msra.mxu0 %v224
    %283 = vmatprep.subr.mxu0 0.0
    %284 = vmatpush1.msra.mxu0 %v225
    %285 = vmatprep.subr.mxu0 0.0
    %286 = vmatpush1.msra.mxu0 %v226
    %287 = vmatprep.subr.mxu0 0.0
    %288 = vmatpush1.msra.mxu0 %v227
    %289 = vmatprep.subr.mxu0 0.0
    %290 = vmatpush1.msra.mxu0 %v228
    %291 = vmatprep.subr.mxu0 0.0
    %292 = vmatpush1.msra.mxu0 %v229
    %293 = vmatprep.subr.mxu0 0.0
    %294 = vmatpush1.msra.mxu0 %v230
    %295 = vmatprep.subr.mxu0 0.0
    %296 = vmatpush1.msra.mxu0 %v231
    %297 = vmatprep.subr.mxu0 0.0
    %298 = vmatpush1.msra.mxu0 %v232
    %299 = vmatprep.subr.mxu0 0.0
    %300 = vmatpush1.msra.mxu0 %v233
    %301 = vmatprep.subr.mxu0 0.0
    %302 = vmatpush1.msra.mxu0 %v234
    %303 = vmatprep.subr.mxu0 0.0
    %304 = vmatpush1.msra.mxu0 %v235
    %305 = vmatprep.subr.mxu0 0.0
    %306 = vmatpush1.msra.mxu0 %v236
    %307 = vmatprep.subr.mxu0 0.0
    %308 = vmatpush1.msra.mxu0 %v237
    %309 = vmatprep.mubr.f32.mxu0 %v205
    %310 = vmatmul.mubr.f32.gmra.mrb[0].mxu0 %v204
    %v311 = vpop.f32.mrb[0].mxu0
    %v312 = vadd.f32 %v243, %v311
    %v313 = vpop.f32.mrb[0].mxu0
    %314 = vdwg.mxu0
    %v315 = vld [vmem:[%s17] sm:$0x1]
    %v316 = vld [vmem:[%s19] sm:$0x1]
    %vm317 = vcmask 261120
    %v318 = vsel %vm317, %v312, 0.0
    %319 = vadd.xlane.f32.xlu0 %v318
    %v320 = vpop.xlane.xlu0 %319
    %v321 = vrcp.pop 32.0
    %v322 = vmul.f32 %v320, %v321
    %v323 = vsub.f32 %v312, %v322
    %v324 = vmul.f32 %v323, %v323
    %v325 = vsel %vm317, %v324, 0.0
    %326 = vadd.xlane.f32.xlu0 %v325
    %v327 = vpop.xlane.xlu0 %326
    %v328 = vmul.f32 %v327, %v321
    %v329 = vadd.f32 %v328, 1e-05
    %v330 = vrsqrt.pop %v329
    %v331 = vmul.f32 %v323, %v330
    %v333 = vlaneseq
    %v334 = vshrl.u32 %v333, 7
    %v335 = vsub.s32 0, %v334
    %v336 = vrot.slane %v315, %v335
    %v338 = vmul.f32 %v331, %v336
    %v340 = vlaneseq
    %v341 = vshrl.u32 %v340, 7
    %v342 = vsub.s32 0, %v341
    %v343 = vrot.slane %v316, %v342
    %v345 = vadd.f32 %v338, %v343
    %v346 = vld [vmem:[%s21] sm:$0x1]
    %v347 = vld [vmem:[%s23] sm:$0x1f]
    %v349 = vrot.slane %v345, 7
    %v352 = vlaneseq
    %v353 = vshrl.u32 %v352, 7
    %v354 = vsub.s32 0, %v353
    %v355 = vrot.slane %v346, %v354
    %v357 = vrot.slane %v345, 6
    %vm359 = vcmask 1040384
    %v360 = vsel %vm359, %v346, %v349
    %vm361 = vcmask 1044480
    %v362 = vsel %vm361, %v360, %v355
    %vm363 = vcmask 1045504
    %v364 = vsel %vm363, %v362, %v357
    %v366 = vrot.slane %v347, 3
    %v368 = vsel %vm361, %v347, %v366
    %v369 = vadd.f32 %v364, %v368
    %v370 = vadd.f32 %v357, %v366
    %v371 = vld [vmem:[%s3] sm:$0xff]
    %v372 = vld [vmem:[%s3 + $0x8] sm:$0xff]
    %v373 = vld [vmem:[%s3 + $0x10] sm:$0xff]
    %v374 = vld [vmem:[%s3 + $0x18] sm:$0xff]
    %v375 = vld [vmem:[%s3 + $0x20] sm:$0xff]
    %v376 = vld [vmem:[%s5] sm:$0xff]
    %v377 = vld [vmem:[%s5 + $0x8] sm:$0x3]
    %v378 = vld [vmem:[%s7] sm:$0xff]
    %v379 = vld [vmem:[%s7 + $0x8] sm:$0xff]
    %v380 = vld [vmem:[%s7 + $0x10] sm:$0xff]
    %v381 = vld [vmem:[%s7 + $0x18] sm:$0xff]
    %v382 = vld [vmem:[%s7 + $0x20] sm:$0xff]
    %v383 = vld [vmem:[%s25] sm:$0x1]
    %v384 = vld [vmem:[%s27] sm:$0x1]
    %v385 = vsel %vm317, %v369, 0.0
    %386 = vadd.xlane.f32.xlu0 %v385
    %v387 = vpop.xlane.xlu0 %386
    %vm388 = vcmask 254976
    %v389 = vsel %vm388, %v370, 0.0
    %390 = vadd.xlane.f32.xlu0 %v389
    %v391 = vpop.xlane.xlu0 %390
    %v392 = vmul.f32 %v387, %v321
    %v393 = vmul.f32 %v391, %v321
    %v394 = vsub.f32 %v369, %v392
    %v395 = vsub.f32 %v370, %v393
    %v396 = vmul.f32 %v394, %v394
    %v397 = vmul.f32 %v395, %v395
    %v398 = vsel %vm317, %v396, 0.0
    %399 = vadd.xlane.f32.xlu0 %v398
    %v400 = vpop.xlane.xlu0 %399
    %v401 = vsel %vm388, %v397, 0.0
    %402 = vadd.xlane.f32.xlu0 %v401
    %v403 = vpop.xlane.xlu0 %402
    %v404 = vmul.f32 %v400, %v321
    %v405 = vmul.f32 %v403, %v321
    %v406 = vadd.f32 %v404, 1e-05
    %v407 = vadd.f32 %v405, 1e-05
    %v408 = vrsqrt.pop %v406
    %v409 = vrsqrt.pop %v407
    %v410 = vmul.f32 %v394, %v408
    %v411 = vmul.f32 %v395, %v409
    %v413 = vlaneseq
    %v414 = vshrl.u32 %v413, 7
    %v415 = vsub.s32 0, %v414
    %v416 = vrot.slane %v383, %v415
    %v418 = vmul.f32 %v410, %v416
    %v419 = vmul.f32 %v411, %v416
    %v421 = vlaneseq
    %v422 = vshrl.u32 %v421, 7
    %v423 = vsub.s32 0, %v422
    %v424 = vrot.slane %v384, %v423
    %v426 = vadd.f32 %v418, %v424
    %v427 = vadd.f32 %v419, %v424
    %v428 = vld [vmem:[%s29] sm:$0xff]
    %v429 = vld [vmem:[%s29 + $0x8] sm:$0xff]
    %v430 = vld [vmem:[%s29 + $0x10] sm:$0xff]
    %v431 = vld [vmem:[%s29 + $0x18] sm:$0xff]
    %v433 = vsel %vm317, %v426, 0
    %v436 = vsel %vm317, %v427, 0
    %438 = vmatprep.subr.mxu0 0.0
    %439 = vmatpush1.msra.mxu0 %v428
    %440 = vmatprep.subr.mxu0 0.0
    %441 = vmatpush1.msra.mxu0 %v429
    %442 = vmatprep.subr.mxu0 0.0
    %443 = vmatpush1.msra.mxu0 %v430
    %444 = vmatprep.subr.mxu0 0.0
    %445 = vmatpush1.msra.mxu0 %v431
    %446 = vmatprep.subr.mxu0 0.0
    %447 = vmatpush1.msra.mxu0 0.0
    %448 = vmatprep.subr.mxu0 0.0
    %449 = vmatpush1.msra.mxu0 0.0
    %450 = vmatprep.subr.mxu0 0.0
    %451 = vmatpush1.msra.mxu0 0.0
    %452 = vmatprep.subr.mxu0 0.0
    %453 = vmatpush1.msra.mxu0 0.0
    %454 = vmatprep.subr.mxu0 0.0
    %455 = vmatpush1.msra.mxu0 0.0
    %456 = vmatprep.subr.mxu0 0.0
    %457 = vmatpush1.msra.mxu0 0.0
    %458 = vmatprep.subr.mxu0 0.0
    %459 = vmatpush1.msra.mxu0 0.0
    %460 = vmatprep.subr.mxu0 0.0
    %461 = vmatpush1.msra.mxu0 0.0
    %462 = vmatprep.subr.mxu0 0.0
    %463 = vmatpush1.msra.mxu0 0.0
    %464 = vmatprep.subr.mxu0 0.0
    %465 = vmatpush1.msra.mxu0 0.0
    %466 = vmatprep.subr.mxu0 0.0
    %467 = vmatpush1.msra.mxu0 0.0
    %468 = vmatprep.subr.mxu0 0.0
    %469 = vmatpush1.msra.mxu0 0.0
    %470 = vmatprep.subr.mxu0 0.0
    %471 = vmatpush1.msra.mxu0 0.0
    %472 = vmatprep.subr.mxu0 0.0
    %473 = vmatpush1.msra.mxu0 0.0
    %474 = vmatprep.subr.mxu0 0.0
    %475 = vmatpush1.msra.mxu0 0.0
    %476 = vmatprep.subr.mxu0 0.0
    %477 = vmatpush1.msra.mxu0 0.0
    %478 = vmatprep.subr.mxu0 0.0
    %479 = vmatpush1.msra.mxu0 0.0
    %480 = vmatprep.subr.mxu0 0.0
    %481 = vmatpush1.msra.mxu0 0.0
    %482 = vmatprep.subr.mxu0 0.0
    %483 = vmatpush1.msra.mxu0 0.0
    %484 = vmatprep.subr.mxu0 0.0
    %485 = vmatpush1.msra.mxu0 0.0
    %486 = vmatprep.subr.mxu0 0.0
    %487 = vmatpush1.msra.mxu0 0.0
    %488 = vmatprep.subr.mxu0 0.0
    %489 = vmatpush1.msra.mxu0 0.0
    %490 = vmatprep.subr.mxu0 0.0
    %491 = vmatpush1.msra.mxu0 0.0
    %492 = vmatprep.subr.mxu0 0.0
    %493 = vmatpush1.msra.mxu0 0.0
    %494 = vmatprep.subr.mxu0 0.0
    %495 = vmatpush1.msra.mxu0 0.0
    %496 = vmatprep.subr.mxu0 0.0
    %497 = vmatpush1.msra.mxu0 0.0
    %498 = vmatprep.subr.mxu0 0.0
    %499 = vmatpush1.msra.mxu0 0.0
    %500 = vmatprep.subr.mxu0 0.0
    %501 = vmatpush1.msra.mxu0 0.0
    %502 = vmatprep.mubr.f32.mxu0 0.0
    %503 = vmatmul.mubr.f32.gmra.mrb[0].mxu0 %v433
    %v504 = vpop.f32.mrb[0].mxu0
    %v505 = vadd.f32 0.0, %v504
    %v506 = vpop.f32.mrb[0].mxu0
    %507 = vmatprep.mubr.f32.mxu0 0.0
    %508 = vmatmul.mubr.f32.gmra.mrb[0].mxu0 %v436
    %v509 = vpop.f32.mrb[0].mxu0
    %v510 = vadd.f32 0.0, %v509
    %v511 = vpop.f32.mrb[0].mxu0
    %512 = vdwg.mxu0
    %vm515 = vcmask 1041408
    %v516 = vrot.slane %v505, 6
    %v517 = vrot.slane %v510, 6
    %v518 = vsel %vm515, %v516, %v517
    %vm521 = vcmask 1043456
    %v522 = vrot.slane %v505, 4
    %v523 = vrot.slane %v510, 4
    %v524 = vsel %vm521, %v522, %v523
    %v527 = vrot.slane %v505, 2
    %v528 = vrot.slane %v510, 2
    %v529 = vsel %vm363, %v527, %v528
    %v532 = vsel %vm515, %v510, %v516
    %v533 = vsel %vm521, %v518, %v522
    %v534 = vsel %vm363, %v524, %v527
    %540 = vrot.lane.b32.xlu0 %v371, 32
    %v541 = vpop.permute.xlu0 %540
    %542 = vrot.lane.b32.xlu0 %v372, 32
    %v543 = vpop.permute.xlu0 %542
    %544 = vrot.lane.b32.xlu0 %v373, 32
    %v545 = vpop.permute.xlu0 %544
    %546 = vrot.lane.b32.xlu0 %v374, 32
    %v547 = vpop.permute.xlu0 %546
    %548 = vrot.lane.b32.xlu0 %v375, 32
    %v549 = vpop.permute.xlu0 %548
    %v555 = vmul.f32 %v505, %v541
    %v556 = vmul.f32 %v532, %v543
    %v557 = vmul.f32 %v533, %v545
    %v558 = vmul.f32 %v534, %v547
    %v559 = vmul.f32 %v529, %v549
    %560 = vrot.lane.b32.xlu0 %v371, 64
    %v561 = vpop.permute.xlu0 %560
    %562 = vrot.lane.b32.xlu0 %v372, 64
    %v563 = vpop.permute.xlu0 %562
    %564 = vrot.lane.b32.xlu0 %v373, 64
    %v565 = vpop.permute.xlu0 %564
    %566 = vrot.lane.b32.xlu0 %v374, 64
    %v567 = vpop.permute.xlu0 %566
    %568 = vrot.lane.b32.xlu0 %v375, 64
    %v569 = vpop.permute.xlu0 %568
    %v575 = vmul.f32 %v505, %v561
    %v576 = vmul.f32 %v532, %v563
    %v577 = vmul.f32 %v533, %v565
    %v578 = vmul.f32 %v534, %v567
    %v579 = vmul.f32 %v529, %v569
    %585 = vrot.lane.b32.xlu0 %v555, 96
    %v586 = vpop.permute.xlu0 %585
    %587 = vrot.lane.b32.xlu0 %v556, 96
    %v588 = vpop.permute.xlu0 %587
    %589 = vrot.lane.b32.xlu0 %v557, 96
    %v590 = vpop.permute.xlu0 %589
    %591 = vrot.lane.b32.xlu0 %v558, 96
    %v592 = vpop.permute.xlu0 %591
    %593 = vrot.lane.b32.xlu0 %v559, 96
    %v594 = vpop.permute.xlu0 %593
    %v595 = vsel %vm317, %v505, 0
    %v597 = vsel %vm317, %v510, 0
    %v599 = vsel %vm317, %v586, 0
    %v601 = vsel %vm317, %v588, 0
    %v603 = vsel %vm317, %v590, 0
    %v605 = vsel %vm317, %v592, 0
    %v607 = vsel %vm317, %v594, 0
    %609 = vmatprep.subr.mxu0 0.0
    %610 = vmatpush1.xpose.msra.mxu0 %v599
    %611 = vmatprep.subr.mxu0 0.0
    %612 = vmatpush1.xpose.msra.mxu0 %v601
    %613 = vmatprep.subr.mxu0 0.0
    %614 = vmatpush1.xpose.msra.mxu0 %v603
    %615 = vmatprep.subr.mxu0 0.0
    %616 = vmatpush1.xpose.msra.mxu0 %v605
    %617 = vmatprep.subr.mxu0 0.0
    %618 = vmatpush1.xpose.msra.mxu0 %v607
    %619 = vmatprep.subr.mxu0 0.0
    %620 = vmatpush1.xpose.msra.mxu0 0.0
    %621 = vmatprep.subr.mxu0 0.0
    %622 = vmatpush1.xpose.msra.mxu0 0.0
    %623 = vmatprep.subr.mxu0 0.0
    %624 = vmatpush1.xpose.msra.mxu0 0.0
    %625 = vmatprep.subr.mxu0 0.0
    %626 = vmatpush1.xpose.msra.mxu0 0.0
    %627 = vmatprep.subr.mxu0 0.0
    %628 = vmatpush1.xpose.msra.mxu0 0.0
    %629 = vmatprep.subr.mxu0 0.0
    %630 = vmatpush1.xpose.msra.mxu0 0.0
    %631 = vmatprep.subr.mxu0 0.0
    %632 = vmatpush1.xpose.msra.mxu0 0.0
    %633 = vmatprep.subr.mxu0 0.0
    %634 = vmatpush1.xpose.msra.mxu0 0.0
    %635 = vmatprep.subr.mxu0 0.0
    %636 = vmatpush1.xpose.msra.mxu0 0.0
    %637 = vmatprep.subr.mxu0 0.0
    %638 = vmatpush1.xpose.msra.mxu0 0.0
    %639 = vmatprep.subr.mxu0 0.0
    %640 = vmatpush1.xpose.msra.mxu0 0.0
    %641 = vmatprep.subr.mxu0 0.0
    %642 = vmatpush1.xpose.msra.mxu0 0.0
    %643 = vmatprep.subr.mxu0 0.0
    %644 = vmatpush1.xpose.msra.mxu0 0.0
    %645 = vmatprep.subr.mxu0 0.0
    %646 = vmatpush1.xpose.msra.mxu0 0.0
    %647 = vmatprep.subr.mxu0 0.0
    %648 = vmatpush1.xpose.msra.mxu0 0.0
    %649 = vmatprep.subr.mxu0 0.0
    %650 = vmatpush1.xpose.msra.mxu0 0.0
    %651 = vmatprep.subr.mxu0 0.0
    %652 = vmatpush1.xpose.msra.mxu0 0.0
    %653 = vmatprep.subr.mxu0 0.0
    %654 = vmatpush1.xpose.msra.mxu0 0.0
    %655 = vmatprep.subr.mxu0 0.0
    %656 = vmatpush1.xpose.msra.mxu0 0.0
    %657 = vmatprep.subr.mxu0 0.0
    %658 = vmatpush1.xpose.msra.mxu0 0.0
    %659 = vmatprep.subr.mxu0 0.0
    %660 = vmatpush1.xpose.msra.mxu0 0.0
    %661 = vmatprep.subr.mxu0 0.0
    %662 = vmatpush1.xpose.msra.mxu0 0.0
    %663 = vmatprep.subr.mxu0 0.0
    %664 = vmatpush1.xpose.msra.mxu0 0.0
    %665 = vmatprep.subr.mxu0 0.0
    %666 = vmatpush1.xpose.msra.mxu0 0.0
    %667 = vmatprep.subr.mxu0 0.0
    %668 = vmatpush1.xpose.msra.mxu0 0.0
    %669 = vmatprep.subr.mxu0 0.0
    %670 = vmatpush1.xpose.msra.mxu0 0.0
    %671 = vmatprep.subr.mxu0 0.0
    %672 = vmatpush1.xpose.msra.mxu0 0.0
    %673 = vmatprep.mubr.f32.mxu0 0.0
    %674 = vmatmul.mubr.f32.gmra.mrb[0].mxu0 %v595
    %v675 = vpop.f32.mrb[0].mxu0
    %v676 = vadd.f32 0.0, %v675
    %v677 = vpop.f32.mrb[0].mxu0
    %678 = vmatprep.mubr.f32.mxu0 0.0
    %679 = vmatmul.mubr.f32.gmra.mrb[0].mxu0 %v597
    %v680 = vpop.f32.mrb[0].mxu0
    %v681 = vadd.f32 0.0, %v680
    %v682 = vpop.f32.mrb[0].mxu0
    %683 = vdwg.mxu0
    %v684 = vmul.f32 %v676, 0.35355338
    %v685 = vmul.f32 %v681, 0.35355338
    %v686 = vadd.f32 %v684, %v376
    %v687 = vadd.f32 %v685, %v377
    %vm688 = vcmask 326656
    %v689 = vsel %vm688, %v686, -inf
    %690 = vmax.xlane.f32.xlu0 %v689
    %v691 = vpop.xlane.xlu0 %690
    %vm692 = vcmask 320512
    %v693 = vsel %vm692, %v687, -inf
    %694 = vmax.xlane.f32.xlu0 %v693
    %v695 = vpop.xlane.xlu0 %694
    %v696 = vsub.f32 %v686, %v691
    %v697 = vsub.f32 %v687, %v695
    %v698 = vmul.f32 %v696, 1.442695
    %v699 = vpow.pop %v698
    %v700 = vmul.f32 %v697, 1.442695
    %v701 = vpow.pop %v700
    %v703 = vsel %vm688, %v699, 0
    %v706 = vsel %vm688, %v701, 0
    %708 = vmatprep.subr.mxu0 0.0
    %709 = vmatpush1.msra.mxu0 %v378
    %710 = vmatprep.subr.mxu0 0.0
    %711 = vmatpush1.msra.mxu0 %v379
    %712 = vmatprep.subr.mxu0 0.0
    %713 = vmatpush1.msra.mxu0 %v380
    %714 = vmatprep.subr.mxu0 0.0
    %715 = vmatpush1.msra.mxu0 %v381
    %716 = vmatprep.subr.mxu0 0.0
    %717 = vmatpush1.msra.mxu0 %v382
    %718 = vmatprep.subr.mxu0 0.0
    %719 = vmatpush1.msra.mxu0 0.0
    %720 = vmatprep.subr.mxu0 0.0
    %721 = vmatpush1.msra.mxu0 0.0
    %722 = vmatprep.subr.mxu0 0.0
    %723 = vmatpush1.msra.mxu0 0.0
    %724 = vmatprep.subr.mxu0 0.0
    %725 = vmatpush1.msra.mxu0 0.0
    %726 = vmatprep.subr.mxu0 0.0
    %727 = vmatpush1.msra.mxu0 0.0
    %728 = vmatprep.subr.mxu0 0.0
    %729 = vmatpush1.msra.mxu0 0.0
    %730 = vmatprep.subr.mxu0 0.0
    %731 = vmatpush1.msra.mxu0 0.0
    %732 = vmatprep.subr.mxu0 0.0
    %733 = vmatpush1.msra.mxu0 0.0
    %734 = vmatprep.subr.mxu0 0.0
    %735 = vmatpush1.msra.mxu0 0.0
    %736 = vmatprep.subr.mxu0 0.0
    %737 = vmatpush1.msra.mxu0 0.0
    %738 = vmatprep.subr.mxu0 0.0
    %739 = vmatpush1.msra.mxu0 0.0
    %740 = vmatprep.subr.mxu0 0.0
    %741 = vmatpush1.msra.mxu0 0.0
    %742 = vmatprep.subr.mxu0 0.0
    %743 = vmatpush1.msra.mxu0 0.0
    %744 = vmatprep.subr.mxu0 0.0
    %745 = vmatpush1.msra.mxu0 0.0
    %746 = vmatprep.subr.mxu0 0.0
    %747 = vmatpush1.msra.mxu0 0.0
    %748 = vmatprep.subr.mxu0 0.0
    %749 = vmatpush1.msra.mxu0 0.0
    %750 = vmatprep.subr.mxu0 0.0
    %751 = vmatpush1.msra.mxu0 0.0
    %752 = vmatprep.subr.mxu0 0.0
    %753 = vmatpush1.msra.mxu0 0.0
    %754 = vmatprep.subr.mxu0 0.0
    %755 = vmatpush1.msra.mxu0 0.0
    %756 = vmatprep.subr.mxu0 0.0
    %757 = vmatpush1.msra.mxu0 0.0
    %758 = vmatprep.subr.mxu0 0.0
    %759 = vmatpush1.msra.mxu0 0.0
    %760 = vmatprep.subr.mxu0 0.0
    %761 = vmatpush1.msra.mxu0 0.0
    %762 = vmatprep.subr.mxu0 0.0
    %763 = vmatpush1.msra.mxu0 0.0
    %764 = vmatprep.subr.mxu0 0.0
    %765 = vmatpush1.msra.mxu0 0.0
    %766 = vmatprep.subr.mxu0 0.0
    %767 = vmatpush1.msra.mxu0 0.0
    %768 = vmatprep.subr.mxu0 0.0
    %769 = vmatpush1.msra.mxu0 0.0
    %770 = vmatprep.subr.mxu0 0.0
    %771 = vmatpush1.msra.mxu0 0.0
    %772 = vmatprep.mubr.f32.mxu0 0.0
    %773 = vmatmul.mubr.f32.gmra.mrb[0].mxu0 %v703
    %v774 = vpop.f32.mrb[0].mxu0
    %v775 = vadd.f32 0.0, %v774
    %v776 = vpop.f32.mrb[0].mxu0
    %777 = vmatprep.mubr.f32.mxu0 0.0
    %778 = vmatmul.mubr.f32.gmra.mrb[0].mxu0 %v706
    %v779 = vpop.f32.mrb[0].mxu0
    %v780 = vadd.f32 0.0, %v779
    %v781 = vpop.f32.mrb[0].mxu0
    %782 = vdwg.mxu0
    %v783 = vrcp.pop %v775
    %v784 = vrcp.pop %v780
    %v785 = vmul.f32 %v699, %v783
    %v786 = vmul.f32 %v701, %v784
    %792 = vrot.lane.b32.xlu0 %v575, 64
    %v793 = vpop.permute.xlu0 %792
    %794 = vrot.lane.b32.xlu0 %v576, 64
    %v795 = vpop.permute.xlu0 %794
    %796 = vrot.lane.b32.xlu0 %v577, 64
    %v797 = vpop.permute.xlu0 %796
    %798 = vrot.lane.b32.xlu0 %v578, 64
    %v799 = vpop.permute.xlu0 %798
    %800 = vrot.lane.b32.xlu0 %v579, 64
    %v801 = vpop.permute.xlu0 %800
    %v808 = vsel %vm688, %v785, 0
    %v811 = vsel %vm688, %v786, 0
    %813 = vmatprep.subr.mxu0 0.0
    %814 = vmatpush1.msra.mxu0 %v793
    %815 = vmatprep.subr.mxu0 0.0
    %816 = vmatpush1.msra.mxu0 %v795
    %817 = vmatprep.subr.mxu0 0.0
    %818 = vmatpush1.msra.mxu0 %v797
    %819 = vmatprep.subr.mxu0 0.0
    %820 = vmatpush1.msra.mxu0 %v799
    %821 = vmatprep.subr.mxu0 0.0
    %822 = vmatpush1.msra.mxu0 %v801
    %823 = vmatprep.subr.mxu0 0.0
    %824 = vmatpush1.msra.mxu0 0.0
    %825 = vmatprep.subr.mxu0 0.0
    %826 = vmatpush1.msra.mxu0 0.0
    %827 = vmatprep.subr.mxu0 0.0
    %828 = vmatpush1.msra.mxu0 0.0
    %829 = vmatprep.subr.mxu0 0.0
    %830 = vmatpush1.msra.mxu0 0.0
    %831 = vmatprep.subr.mxu0 0.0
    %832 = vmatpush1.msra.mxu0 0.0
    %833 = vmatprep.subr.mxu0 0.0
    %834 = vmatpush1.msra.mxu0 0.0
    %835 = vmatprep.subr.mxu0 0.0
    %836 = vmatpush1.msra.mxu0 0.0
    %837 = vmatprep.subr.mxu0 0.0
    %838 = vmatpush1.msra.mxu0 0.0
    %839 = vmatprep.subr.mxu0 0.0
    %840 = vmatpush1.msra.mxu0 0.0
    %841 = vmatprep.subr.mxu0 0.0
    %842 = vmatpush1.msra.mxu0 0.0
    %843 = vmatprep.subr.mxu0 0.0
    %844 = vmatpush1.msra.mxu0 0.0
    %845 = vmatprep.subr.mxu0 0.0
    %846 = vmatpush1.msra.mxu0 0.0
    %847 = vmatprep.subr.mxu0 0.0
    %848 = vmatpush1.msra.mxu0 0.0
    %849 = vmatprep.subr.mxu0 0.0
    %850 = vmatpush1.msra.mxu0 0.0
    %851 = vmatprep.subr.mxu0 0.0
    %852 = vmatpush1.msra.mxu0 0.0
    %853 = vmatprep.subr.mxu0 0.0
    %854 = vmatpush1.msra.mxu0 0.0
    %855 = vmatprep.subr.mxu0 0.0
    %856 = vmatpush1.msra.mxu0 0.0
    %857 = vmatprep.subr.mxu0 0.0
    %858 = vmatpush1.msra.mxu0 0.0
    %859 = vmatprep.subr.mxu0 0.0
    %860 = vmatpush1.msra.mxu0 0.0
    %861 = vmatprep.subr.mxu0 0.0
    %862 = vmatpush1.msra.mxu0 0.0
    %863 = vmatprep.subr.mxu0 0.0
    %864 = vmatpush1.msra.mxu0 0.0
    %865 = vmatprep.subr.mxu0 0.0
    %866 = vmatpush1.msra.mxu0 0.0
    %867 = vmatprep.subr.mxu0 0.0
    %868 = vmatpush1.msra.mxu0 0.0
    %869 = vmatprep.subr.mxu0 0.0
    %870 = vmatpush1.msra.mxu0 0.0
    %871 = vmatprep.subr.mxu0 0.0
    %872 = vmatpush1.msra.mxu0 0.0
    %873 = vmatprep.subr.mxu0 0.0
    %874 = vmatpush1.msra.mxu0 0.0
    %875 = vmatprep.subr.mxu0 0.0
    %876 = vmatpush1.msra.mxu0 0.0
    %877 = vmatprep.mubr.f32.mxu0 0.0
    %878 = vmatmul.mubr.f32.gmra.mrb[0].mxu0 %v808
    %v879 = vpop.f32.mrb[0].mxu0
    %v880 = vadd.f32 0.0, %v879
    %v881 = vpop.f32.mrb[0].mxu0
    %882 = vmatprep.mubr.f32.mxu0 0.0
    %883 = vmatmul.mubr.f32.gmra.mrb[0].mxu0 %v811
    %v884 = vpop.f32.mrb[0].mxu0
    %v885 = vadd.f32 0.0, %v884
    %v886 = vpop.f32.mrb[0].mxu0
    %887 = vdwg.mxu0
    %v888 = vld [vmem:[%s31] sm:$0xff]
    %v889 = vld [vmem:[%s31 + $0x8] sm:$0xff]
    %v890 = vld [vmem:[%s31 + $0x10] sm:$0xff]
    %v891 = vld [vmem:[%s31 + $0x18] sm:$0xff]
    %v892 = vld [vmem:[%s33] sm:$0x1]
    %v894 = vlaneseq
    %v895 = vshrl.u32 %v894, 7
    %v896 = vsub.s32 0, %v895
    %v897 = vrot.slane %v892, %v896
    %v900 = vsel %vm317, %v880, 0
    %v903 = vsel %vm317, %v885, 0
    %905 = vmatprep.subr.mxu0 0.0
    %906 = vmatpush1.msra.mxu0 %v888
    %907 = vmatprep.subr.mxu0 0.0
    %908 = vmatpush1.msra.mxu0 %v889
    %909 = vmatprep.subr.mxu0 0.0
    %910 = vmatpush1.msra.mxu0 %v890
    %911 = vmatprep.subr.mxu0 0.0
    %912 = vmatpush1.msra.mxu0 %v891
    %913 = vmatprep.subr.mxu0 0.0
    %914 = vmatpush1.msra.mxu0 0.0
    %915 = vmatprep.subr.mxu0 0.0
    %916 = vmatpush1.msra.mxu0 0.0
    %917 = vmatprep.subr.mxu0 0.0
    %918 = vmatpush1.msra.mxu0 0.0
    %919 = vmatprep.subr.mxu0 0.0
    %920 = vmatpush1.msra.mxu0 0.0
    %921 = vmatprep.subr.mxu0 0.0
    %922 = vmatpush1.msra.mxu0 0.0
    %923 = vmatprep.subr.mxu0 0.0
    %924 = vmatpush1.msra.mxu0 0.0
    %925 = vmatprep.subr.mxu0 0.0
    %926 = vmatpush1.msra.mxu0 0.0
    %927 = vmatprep.subr.mxu0 0.0
    %928 = vmatpush1.msra.mxu0 0.0
    %929 = vmatprep.subr.mxu0 0.0
    %930 = vmatpush1.msra.mxu0 0.0
    %931 = vmatprep.subr.mxu0 0.0
    %932 = vmatpush1.msra.mxu0 0.0
    %933 = vmatprep.subr.mxu0 0.0
    %934 = vmatpush1.msra.mxu0 0.0
    %935 = vmatprep.subr.mxu0 0.0
    %936 = vmatpush1.msra.mxu0 0.0
    %937 = vmatprep.subr.mxu0 0.0
    %938 = vmatpush1.msra.mxu0 0.0
    %939 = vmatprep.subr.mxu0 0.0
    %940 = vmatpush1.msra.mxu0 0.0
    %941 = vmatprep.subr.mxu0 0.0
    %942 = vmatpush1.msra.mxu0 0.0
    %943 = vmatprep.subr.mxu0 0.0
    %944 = vmatpush1.msra.mxu0 0.0
    %945 = vmatprep.subr.mxu0 0.0
    %946 = vmatpush1.msra.mxu0 0.0
    %947 = vmatprep.subr.mxu0 0.0
    %948 = vmatpush1.msra.mxu0 0.0
    %949 = vmatprep.subr.mxu0 0.0
    %950 = vmatpush1.msra.mxu0 0.0
    %951 = vmatprep.subr.mxu0 0.0
    %952 = vmatpush1.msra.mxu0 0.0
    %953 = vmatprep.subr.mxu0 0.0
    %954 = vmatpush1.msra.mxu0 0.0
    %955 = vmatprep.subr.mxu0 0.0
    %956 = vmatpush1.msra.mxu0 0.0
    %957 = vmatprep.subr.mxu0 0.0
    %958 = vmatpush1.msra.mxu0 0.0
    %959 = vmatprep.subr.mxu0 0.0
    %960 = vmatpush1.msra.mxu0 0.0
    %961 = vmatprep.subr.mxu0 0.0
    %962 = vmatpush1.msra.mxu0 0.0
    %963 = vmatprep.subr.mxu0 0.0
    %964 = vmatpush1.msra.mxu0 0.0
    %965 = vmatprep.subr.mxu0 0.0
    %966 = vmatpush1.msra.mxu0 0.0
    %967 = vmatprep.subr.mxu0 0.0
    %968 = vmatpush1.msra.mxu0 0.0
    %969 = vmatprep.mubr.f32.mxu0 0.0
    %970 = vmatmul.mubr.f32.gmra.mrb[0].mxu0 %v900
    %v971 = vpop.f32.mrb[0].mxu0
    %v972 = vadd.f32 %v897, %v971
    %v973 = vpop.f32.mrb[0].mxu0
    %974 = vmatprep.mubr.f32.mxu0 0.0
    %975 = vmatmul.mubr.f32.gmra.mrb[0].mxu0 %v903
    %v976 = vpop.f32.mrb[0].mxu0
    %v977 = vadd.f32 %v897, %v976
    %v978 = vpop.f32.mrb[0].mxu0
    %979 = vdwg.mxu0
    %v980 = vadd.f32 %v972, %v369
    %v981 = vadd.f32 %v977, %v370
    %v982 = vld [vmem:[%s35] sm:$0x1]
    %v983 = vld [vmem:[%s37] sm:$0x1]
    %v984 = vsel %vm317, %v980, 0.0
    %985 = vadd.xlane.f32.xlu0 %v984
    %v986 = vpop.xlane.xlu0 %985
    %v987 = vsel %vm388, %v981, 0.0
    %988 = vadd.xlane.f32.xlu0 %v987
    %v989 = vpop.xlane.xlu0 %988
    %v990 = vmul.f32 %v986, %v321
    %v991 = vmul.f32 %v989, %v321
    %v992 = vsub.f32 %v980, %v990
    %v993 = vsub.f32 %v981, %v991
    %v994 = vmul.f32 %v992, %v992
    %v995 = vmul.f32 %v993, %v993
    %v996 = vsel %vm317, %v994, 0.0
    %997 = vadd.xlane.f32.xlu0 %v996
    %v998 = vpop.xlane.xlu0 %997
    %v999 = vsel %vm388, %v995, 0.0
    %1000 = vadd.xlane.f32.xlu0 %v999
    %v1001 = vpop.xlane.xlu0 %1000
    %v1002 = vmul.f32 %v998, %v321
    %v1003 = vmul.f32 %v1001, %v321
    %v1004 = vadd.f32 %v1002, 1e-05
    %v1005 = vadd.f32 %v1003, 1e-05
    %v1006 = vrsqrt.pop %v1004
    %v1007 = vrsqrt.pop %v1005
    %v1008 = vmul.f32 %v992, %v1006
    %v1009 = vmul.f32 %v993, %v1007
    %v1011 = vlaneseq
    %v1012 = vshrl.u32 %v1011, 7
    %v1013 = vsub.s32 0, %v1012
    %v1014 = vrot.slane %v982, %v1013
    %v1016 = vmul.f32 %v1008, %v1014
    %v1017 = vmul.f32 %v1009, %v1014
    %v1019 = vlaneseq
    %v1020 = vshrl.u32 %v1019, 7
    %v1021 = vsub.s32 0, %v1020
    %v1022 = vrot.slane %v983, %v1021
    %v1024 = vadd.f32 %v1016, %v1022
    %v1025 = vadd.f32 %v1017, %v1022
    %v1026 = vld [vmem:[%s39] sm:$0xff]
    %v1027 = vld [vmem:[%s39 + $0x8] sm:$0xff]
    %v1028 = vld [vmem:[%s39 + $0x10] sm:$0xff]
    %v1029 = vld [vmem:[%s39 + $0x18] sm:$0xff]
    %v1030 = vld [vmem:[%s41] sm:$0x1]
    %v1032 = vlaneseq
    %v1033 = vshrl.u32 %v1032, 7
    %v1034 = vsub.s32 0, %v1033
    %v1035 = vrot.slane %v1030, %v1034
    %v1038 = vsel %vm317, %v1024, 0
    %v1041 = vsel %vm317, %v1025, 0
    %1043 = vmatprep.subr.mxu0 0.0
    %1044 = vmatpush1.msra.mxu0 %v1026
    %1045 = vmatprep.subr.mxu0 0.0
    %1046 = vmatpush1.msra.mxu0 %v1027
    %1047 = vmatprep.subr.mxu0 0.0
    %1048 = vmatpush1.msra.mxu0 %v1028
    %1049 = vmatprep.subr.mxu0 0.0
    %1050 = vmatpush1.msra.mxu0 %v1029
    %1051 = vmatprep.subr.mxu0 0.0
    %1052 = vmatpush1.msra.mxu0 0.0
    %1053 = vmatprep.subr.mxu0 0.0
    %1054 = vmatpush1.msra.mxu0 0.0
    %1055 = vmatprep.subr.mxu0 0.0
    %1056 = vmatpush1.msra.mxu0 0.0
    %1057 = vmatprep.subr.mxu0 0.0
    %1058 = vmatpush1.msra.mxu0 0.0
    %1059 = vmatprep.subr.mxu0 0.0
    %1060 = vmatpush1.msra.mxu0 0.0
    %1061 = vmatprep.subr.mxu0 0.0
    %1062 = vmatpush1.msra.mxu0 0.0
    %1063 = vmatprep.subr.mxu0 0.0
    %1064 = vmatpush1.msra.mxu0 0.0
    %1065 = vmatprep.subr.mxu0 0.0
    %1066 = vmatpush1.msra.mxu0 0.0
    %1067 = vmatprep.subr.mxu0 0.0
    %1068 = vmatpush1.msra.mxu0 0.0
    %1069 = vmatprep.subr.mxu0 0.0
    %1070 = vmatpush1.msra.mxu0 0.0
    %1071 = vmatprep.subr.mxu0 0.0
    %1072 = vmatpush1.msra.mxu0 0.0
    %1073 = vmatprep.subr.mxu0 0.0
    %1074 = vmatpush1.msra.mxu0 0.0
    %1075 = vmatprep.subr.mxu0 0.0
    %1076 = vmatpush1.msra.mxu0 0.0
    %1077 = vmatprep.subr.mxu0 0.0
    %1078 = vmatpush1.msra.mxu0 0.0
    %1079 = vmatprep.subr.mxu0 0.0
    %1080 = vmatpush1.msra.mxu0 0.0
    %1081 = vmatprep.subr.mxu0 0.0
    %1082 = vmatpush1.msra.mxu0 0.0
    %1083 = vmatprep.subr.mxu0 0.0
    %1084 = vmatpush1.msra.mxu0 0.0
    %1085 = vmatprep.subr.mxu0 0.0
    %1086 = vmatpush1.msra.mxu0 0.0
    %1087 = vmatprep.subr.mxu0 0.0
    %1088 = vmatpush1.msra.mxu0 0.0
    %1089 = vmatprep.subr.mxu0 0.0
    %1090 = vmatpush1.msra.mxu0 0.0
    %1091 = vmatprep.subr.mxu0 0.0
    %1092 = vmatpush1.msra.mxu0 0.0
    %1093 = vmatprep.subr.mxu0 0.0
    %1094 = vmatpush1.msra.mxu0 0.0
    %1095 = vmatprep.subr.mxu0 0.0
    %1096 = vmatpush1.msra.mxu0 0.0
    %1097 = vmatprep.subr.mxu0 0.0
    %1098 = vmatpush1.msra.mxu0 0.0
    %1099 = vmatprep.subr.mxu0 0.0
    %1100 = vmatpush1.msra.mxu0 0.0
    %1101 = vmatprep.subr.mxu0 0.0
    %1102 = vmatpush1.msra.mxu0 0.0
    %1103 = vmatprep.subr.mxu0 0.0
    %1104 = vmatpush1.msra.mxu0 0.0
    %1105 = vmatprep.subr.mxu0 0.0
    %1106 = vmatpush1.msra.mxu0 0.0
    %1107 = vmatprep.mubr.f32.mxu0 0.0
    %1108 = vmatmul.mubr.f32.gmra.mrb[0].mxu0 %v1038
    %v1109 = vpop.f32.mrb[0].mxu0
    %v1110 = vadd.f32 %v1035, %v1109
    %v1111 = vpop.f32.mrb[0].mxu0
    %1112 = vmatprep.mubr.f32.mxu0 0.0
    %1113 = vmatmul.mubr.f32.gmra.mrb[0].mxu0 %v1041
    %v1114 = vpop.f32.mrb[0].mxu0
    %v1115 = vadd.f32 %v1035, %v1114
    %v1116 = vpop.f32.mrb[0].mxu0
    %1117 = vdwg.mxu0
    %v1118 = vmul.f32 %v1110, 0.5
    %v1119 = vmul.f32 %v1115, 0.5
    %v1120 = vmul.f32 %v1110, 0.70710677
    %v1121 = vmul.f32 %v1115, 0.70710677
    %v1122 = vand.u32 2147483647, %v1120
    %v1123 = vand.u32 2147483647, %v1121
    %v1124 = vmul.f32 %v1122, 0.3275911
    %v1125 = vmul.f32 %v1123, 0.3275911
    %v1126 = vadd.f32 %v1124, 1.0
    %v1127 = vadd.f32 %v1125, 1.0
    %v1128 = vrcp.pop %v1126
    %v1129 = vmul.f32 1.0, %v1128
    %v1130 = vrcp.pop %v1127
    %v1131 = vmul.f32 1.0, %v1130
    %v1132 = vmul.f32 %v1129, 1.0614054
    %v1133 = vmul.f32 %v1131, 1.0614054
    %v1134 = vadd.f32 %v1132, -1.4531521
    %v1135 = vadd.f32 %v1133, -1.4531521
    %v1136 = vmul.f32 %v1134, %v1129
    %v1137 = vmul.f32 %v1135, %v1131
    %v1138 = vadd.f32 %v1136, 1.4214138
    %v1139 = vadd.f32 %v1137, 1.4214138
    %v1140 = vmul.f32 %v1138, %v1129
    %v1141 = vmul.f32 %v1139, %v1131
    %v1142 = vadd.f32 %v1140, -0.28449672
    %v1143 = vadd.f32 %v1141, -0.28449672
    %v1144 = vmul.f32 %v1142, %v1129
    %v1145 = vmul.f32 %v1143, %v1131
    %v1146 = vadd.f32 %v1144, 0.2548296
    %v1147 = vadd.f32 %v1145, 0.2548296
    %v1148 = vmul.f32 %v1146, %v1129
    %v1149 = vmul.f32 %v1147, %v1131
    %v1150 = vsub.f32 0.0, %v1122
    %v1151 = vsub.f32 0.0, %v1123
    %v1152 = vmul.f32 %v1150, %v1122
    %v1153 = vmul.f32 %v1151, %v1123
    %v1154 = vmul.f32 %v1152, 1.442695
    %v1155 = vpow.pop %v1154
    %v1156 = vmul.f32 %v1153, 1.442695
    %v1157 = vpow.pop %v1156
    %v1158 = vmul.f32 %v1148, %v1155
    %v1159 = vmul.f32 %v1149, %v1157
    %v1160 = vsub.f32 1.0, %v1158
    %v1161 = vsub.f32 1.0, %v1159
    %vm1162 = vcmp.ge.f32.partialorder %v1120, 0.0
    %vm1163 = vcmp.ge.f32.partialorder %v1121, 0.0
    %v1164 = vsub.f32 0.0, %v1160
    %v1165 = vsub.f32 0.0, %v1161
    %v1166 = vsel %vm1162, %v1160, %v1164
    %v1167 = vsel %vm1163, %v1161, %v1165
    %v1168 = vadd.f32 %v1166, 1.0
    %v1169 = vadd.f32 %v1167, 1.0
    %v1170 = vmul.f32 %v1118, %v1168
    %v1171 = vmul.f32 %v1119, %v1169
    %v1172 = vld [vmem:[%s43] sm:$0xff]
    %v1173 = vld [vmem:[%s43 + $0x8] sm:$0xff]
    %v1174 = vld [vmem:[%s43 + $0x10] sm:$0xff]
    %v1175 = vld [vmem:[%s43 + $0x18] sm:$0xff]
    %v1176 = vld [vmem:[%s43 + $0x20] sm:$0xff]
    %v1177 = vld [vmem:[%s43 + $0x28] sm:$0xff]
    %v1178 = vld [vmem:[%s43 + $0x30] sm:$0xff]
    %v1179 = vld [vmem:[%s43 + $0x38] sm:$0xff]
    %v1180 = vld [vmem:[%s45] sm:$0x1]
    %v1182 = vlaneseq
    %v1183 = vshrl.u32 %v1182, 7
    %v1184 = vsub.s32 0, %v1183
    %v1185 = vrot.slane %v1180, %v1184
    %vm1187 = vcmask 523264
    %v1189 = vsel %vm1187, %v1170, 0
    %v1192 = vsel %vm1187, %v1171, 0
    %1194 = vmatprep.subr.mxu0 0.0
    %1195 = vmatpush1.msra.mxu0 %v1172
    %1196 = vmatprep.subr.mxu0 0.0
    %1197 = vmatpush1.msra.mxu0 %v1173
    %1198 = vmatprep.subr.mxu0 0.0
    %1199 = vmatpush1.msra.mxu0 %v1174
    %1200 = vmatprep.subr.mxu0 0.0
    %1201 = vmatpush1.msra.mxu0 %v1175
    %1202 = vmatprep.subr.mxu0 0.0
    %1203 = vmatpush1.msra.mxu0 %v1176
    %1204 = vmatprep.subr.mxu0 0.0
    %1205 = vmatpush1.msra.mxu0 %v1177
    %1206 = vmatprep.subr.mxu0 0.0
    %1207 = vmatpush1.msra.mxu0 %v1178
    %1208 = vmatprep.subr.mxu0 0.0
    %1209 = vmatpush1.msra.mxu0 %v1179
    %1210 = vmatprep.subr.mxu0 0.0
    %1211 = vmatpush1.msra.mxu0 0.0
    %1212 = vmatprep.subr.mxu0 0.0
    %1213 = vmatpush1.msra.mxu0 0.0
    %1214 = vmatprep.subr.mxu0 0.0
    %1215 = vmatpush1.msra.mxu0 0.0
    %1216 = vmatprep.subr.mxu0 0.0
    %1217 = vmatpush1.msra.mxu0 0.0
    %1218 = vmatprep.subr.mxu0 0.0
    %1219 = vmatpush1.msra.mxu0 0.0
    %1220 = vmatprep.subr.mxu0 0.0
    %1221 = vmatpush1.msra.mxu0 0.0
    %1222 = vmatprep.subr.mxu0 0.0
    %1223 = vmatpush1.msra.mxu0 0.0
    %1224 = vmatprep.subr.mxu0 0.0
    %1225 = vmatpush1.msra.mxu0 0.0
    %1226 = vmatprep.subr.mxu0 0.0
    %1227 = vmatpush1.msra.mxu0 0.0
    %1228 = vmatprep.subr.mxu0 0.0
    %1229 = vmatpush1.msra.mxu0 0.0
    %1230 = vmatprep.subr.mxu0 0.0
    %1231 = vmatpush1.msra.mxu0 0.0
    %1232 = vmatprep.subr.mxu0 0.0
    %1233 = vmatpush1.msra.mxu0 0.0
    %1234 = vmatprep.subr.mxu0 0.0
    %1235 = vmatpush1.msra.mxu0 0.0
    %1236 = vmatprep.subr.mxu0 0.0
    %1237 = vmatpush1.msra.mxu0 0.0
    %1238 = vmatprep.subr.mxu0 0.0
    %1239 = vmatpush1.msra.mxu0 0.0
    %1240 = vmatprep.subr.mxu0 0.0
    %1241 = vmatpush1.msra.mxu0 0.0
    %1242 = vmatprep.subr.mxu0 0.0
    %1243 = vmatpush1.msra.mxu0 0.0
    %1244 = vmatprep.subr.mxu0 0.0
    %1245 = vmatpush1.msra.mxu0 0.0
    %1246 = vmatprep.subr.mxu0 0.0
    %1247 = vmatpush1.msra.mxu0 0.0
    %1248 = vmatprep.subr.mxu0 0.0
    %1249 = vmatpush1.msra.mxu0 0.0
    %1250 = vmatprep.subr.mxu0 0.0
    %1251 = vmatpush1.msra.mxu0 0.0
    %1252 = vmatprep.subr.mxu0 0.0
    %1253 = vmatpush1.msra.mxu0 0.0
    %1254 = vmatprep.subr.mxu0 0.0
    %1255 = vmatpush1.msra.mxu0 0.0
    %1256 = vmatprep.subr.mxu0 0.0
    %1257 = vmatpush1.msra.mxu0 0.0
    %1258 = vmatprep.mubr.f32.mxu0 0.0
    %1259 = vmatmul.mubr.f32.gmra.mrb[0].mxu0 %v1189
    %v1260 = vpop.f32.mrb[0].mxu0
    %v1261 = vadd.f32 %v1185, %v1260
    %v1262 = vpop.f32.mrb[0].mxu0
    %1263 = vmatprep.mubr.f32.mxu0 0.0
    %1264 = vmatmul.mubr.f32.gmra.mrb[0].mxu0 %v1192
    %v1265 = vpop.f32.mrb[0].mxu0
    %v1266 = vadd.f32 %v1185, %v1265
    %v1267 = vpop.f32.mrb[0].mxu0
    %1268 = vdwg.mxu0
    %v1269 = vadd.f32 %v1261, %v980
    %v1270 = vadd.f32 %v1266, %v981
    %v1271 = vld [vmem:[%s47] sm:$0x1]
    %v1272 = vld [vmem:[%s49] sm:$0x1]
    %v1273 = vsel %vm317, %v1269, 0.0
    %1274 = vadd.xlane.f32.xlu0 %v1273
    %v1275 = vpop.xlane.xlu0 %1274
    %v1276 = vsel %vm388, %v1270, 0.0
    %1277 = vadd.xlane.f32.xlu0 %v1276
    %v1278 = vpop.xlane.xlu0 %1277
    %v1279 = vmul.f32 %v1275, %v321
    %v1280 = vmul.f32 %v1278, %v321
    %v1281 = vsub.f32 %v1269, %v1279
    %v1282 = vsub.f32 %v1270, %v1280
    %v1283 = vmul.f32 %v1281, %v1281
    %v1284 = vmul.f32 %v1282, %v1282
    %v1285 = vsel %vm317, %v1283, 0.0
    %1286 = vadd.xlane.f32.xlu0 %v1285
    %v1287 = vpop.xlane.xlu0 %1286
    %v1288 = vsel %vm388, %v1284, 0.0
    %1289 = vadd.xlane.f32.xlu0 %v1288
    %v1290 = vpop.xlane.xlu0 %1289
    %v1291 = vmul.f32 %v1287, %v321
    %v1292 = vmul.f32 %v1290, %v321
    %v1293 = vadd.f32 %v1291, 1e-05
    %v1294 = vadd.f32 %v1292, 1e-05
    %v1295 = vrsqrt.pop %v1293
    %v1296 = vrsqrt.pop %v1294
    %v1297 = vmul.f32 %v1281, %v1295
    %v1298 = vmul.f32 %v1282, %v1296
    %v1300 = vlaneseq
    %v1301 = vshrl.u32 %v1300, 7
    %v1302 = vsub.s32 0, %v1301
    %v1303 = vrot.slane %v1271, %v1302
    %v1305 = vmul.f32 %v1297, %v1303
    %v1306 = vmul.f32 %v1298, %v1303
    %v1308 = vlaneseq
    %v1309 = vshrl.u32 %v1308, 7
    %v1310 = vsub.s32 0, %v1309
    %v1311 = vrot.slane %v1272, %v1310
    %v1313 = vadd.f32 %v1305, %v1311
    %v1314 = vadd.f32 %v1306, %v1311
    %v1315 = vld [vmem:[%s51] sm:$0xff]
    %v1316 = vld [vmem:[%s51 + $0x8] sm:$0xff]
    %v1317 = vld [vmem:[%s51 + $0x10] sm:$0xff]
    %v1318 = vld [vmem:[%s51 + $0x18] sm:$0xff]
    %v1320 = vsel %vm317, %v1313, 0
    %v1323 = vsel %vm317, %v1314, 0
    %1325 = vmatprep.subr.mxu0 0.0
    %1326 = vmatpush1.msra.mxu0 %v1315
    %1327 = vmatprep.subr.mxu0 0.0
    %1328 = vmatpush1.msra.mxu0 %v1316
    %1329 = vmatprep.subr.mxu0 0.0
    %1330 = vmatpush1.msra.mxu0 %v1317
    %1331 = vmatprep.subr.mxu0 0.0
    %1332 = vmatpush1.msra.mxu0 %v1318
    %1333 = vmatprep.subr.mxu0 0.0
    %1334 = vmatpush1.msra.mxu0 0.0
    %1335 = vmatprep.subr.mxu0 0.0
    %1336 = vmatpush1.msra.mxu0 0.0
    %1337 = vmatprep.subr.mxu0 0.0
    %1338 = vmatpush1.msra.mxu0 0.0
    %1339 = vmatprep.subr.mxu0 0.0
    %1340 = vmatpush1.msra.mxu0 0.0
    %1341 = vmatprep.subr.mxu0 0.0
    %1342 = vmatpush1.msra.mxu0 0.0
    %1343 = vmatprep.subr.mxu0 0.0
    %1344 = vmatpush1.msra.mxu0 0.0
    %1345 = vmatprep.subr.mxu0 0.0
    %1346 = vmatpush1.msra.mxu0 0.0
    %1347 = vmatprep.subr.mxu0 0.0
    %1348 = vmatpush1.msra.mxu0 0.0
    %1349 = vmatprep.subr.mxu0 0.0
    %1350 = vmatpush1.msra.mxu0 0.0
    %1351 = vmatprep.subr.mxu0 0.0
    %1352 = vmatpush1.msra.mxu0 0.0
    %1353 = vmatprep.subr.mxu0 0.0
    %1354 = vmatpush1.msra.mxu0 0.0
    %1355 = vmatprep.subr.mxu0 0.0
    %1356 = vmatpush1.msra.mxu0 0.0
    %1357 = vmatprep.subr.mxu0 0.0
    %1358 = vmatpush1.msra.mxu0 0.0
    %1359 = vmatprep.subr.mxu0 0.0
    %1360 = vmatpush1.msra.mxu0 0.0
    %1361 = vmatprep.subr.mxu0 0.0
    %1362 = vmatpush1.msra.mxu0 0.0
    %1363 = vmatprep.subr.mxu0 0.0
    %1364 = vmatpush1.msra.mxu0 0.0
    %1365 = vmatprep.subr.mxu0 0.0
    %1366 = vmatpush1.msra.mxu0 0.0
    %1367 = vmatprep.subr.mxu0 0.0
    %1368 = vmatpush1.msra.mxu0 0.0
    %1369 = vmatprep.subr.mxu0 0.0
    %1370 = vmatpush1.msra.mxu0 0.0
    %1371 = vmatprep.subr.mxu0 0.0
    %1372 = vmatpush1.msra.mxu0 0.0
    %1373 = vmatprep.subr.mxu0 0.0
    %1374 = vmatpush1.msra.mxu0 0.0
    %1375 = vmatprep.subr.mxu0 0.0
    %1376 = vmatpush1.msra.mxu0 0.0
    %1377 = vmatprep.subr.mxu0 0.0
    %1378 = vmatpush1.msra.mxu0 0.0
    %1379 = vmatprep.subr.mxu0 0.0
    %1380 = vmatpush1.msra.mxu0 0.0
    %1381 = vmatprep.subr.mxu0 0.0
    %1382 = vmatpush1.msra.mxu0 0.0
    %1383 = vmatprep.subr.mxu0 0.0
    %1384 = vmatpush1.msra.mxu0 0.0
    %1385 = vmatprep.subr.mxu0 0.0
    %1386 = vmatpush1.msra.mxu0 0.0
    %1387 = vmatprep.subr.mxu0 0.0
    %1388 = vmatpush1.msra.mxu0 0.0
    %1389 = vmatprep.mubr.f32.mxu0 0.0
    %1390 = vmatmul.mubr.f32.gmra.mrb[0].mxu0 %v1320
    %v1391 = vpop.f32.mrb[0].mxu0
    %v1392 = vadd.f32 0.0, %v1391
    %v1393 = vpop.f32.mrb[0].mxu0
    %1394 = vmatprep.mubr.f32.mxu0 0.0
    %1395 = vmatmul.mubr.f32.gmra.mrb[0].mxu0 %v1323
    %v1396 = vpop.f32.mrb[0].mxu0
    %v1397 = vadd.f32 0.0, %v1396
    %v1398 = vpop.f32.mrb[0].mxu0
    %1399 = vdwg.mxu0
    %v1402 = vrot.slane %v1392, 6
    %v1403 = vrot.slane %v1397, 6
    %v1404 = vsel %vm515, %v1402, %v1403
    %v1407 = vrot.slane %v1392, 4
    %v1408 = vrot.slane %v1397, 4
    %v1409 = vsel %vm521, %v1407, %v1408
    %v1412 = vrot.slane %v1392, 2
    %v1413 = vrot.slane %v1397, 2
    %v1414 = vsel %vm363, %v1412, %v1413
    %v1417 = vsel %vm515, %v1397, %v1402
    %v1418 = vsel %vm521, %v1404, %v1407
    %v1419 = vsel %vm363, %v1409, %v1412
    %v1420 = vmul.f32 %v1392, %v541
    %v1421 = vmul.f32 %v1417, %v543
    %v1422 = vmul.f32 %v1418, %v545
    %v1423 = vmul.f32 %v1419, %v547
    %v1424 = vmul.f32 %v1414, %v549
    %v1425 = vmul.f32 %v1392, %v561
    %v1426 = vmul.f32 %v1417, %v563
    %v1427 = vmul.f32 %v1418, %v565
    %v1428 = vmul.f32 %v1419, %v567
    %v1429 = vmul.f32 %v1414, %v569
    %1435 = vrot.lane.b32.xlu0 %v1420, 96
    %v1436 = vpop.permute.xlu0 %1435
    %1437 = vrot.lane.b32.xlu0 %v1421, 96
    %v1438 = vpop.permute.xlu0 %1437
    %1439 = vrot.lane.b32.xlu0 %v1422, 96
    %v1440 = vpop.permute.xlu0 %1439
    %1441 = vrot.lane.b32.xlu0 %v1423, 96
    %v1442 = vpop.permute.xlu0 %1441
    %1443 = vrot.lane.b32.xlu0 %v1424, 96
    %v1444 = vpop.permute.xlu0 %1443
    %v1445 = vsel %vm317, %v1392, 0
    %v1447 = vsel %vm317, %v1397, 0
    %v1449 = vsel %vm317, %v1436, 0
    %v1451 = vsel %vm317, %v1438, 0
    %v1453 = vsel %vm317, %v1440, 0
    %v1455 = vsel %vm317, %v1442, 0
    %v1457 = vsel %vm317, %v1444, 0
    %1459 = vmatprep.subr.mxu0 0.0
    %1460 = vmatpush1.xpose.msra.mxu0 %v1449
    %1461 = vmatprep.subr.mxu0 0.0
    %1462 = vmatpush1.xpose.msra.mxu0 %v1451
    %1463 = vmatprep.subr.mxu0 0.0
    %1464 = vmatpush1.xpose.msra.mxu0 %v1453
    %1465 = vmatprep.subr.mxu0 0.0
    %1466 = vmatpush1.xpose.msra.mxu0 %v1455
    %1467 = vmatprep.subr.mxu0 0.0
    %1468 = vmatpush1.xpose.msra.mxu0 %v1457
    %1469 = vmatprep.subr.mxu0 0.0
    %1470 = vmatpush1.xpose.msra.mxu0 0.0
    %1471 = vmatprep.subr.mxu0 0.0
    %1472 = vmatpush1.xpose.msra.mxu0 0.0
    %1473 = vmatprep.subr.mxu0 0.0
    %1474 = vmatpush1.xpose.msra.mxu0 0.0
    %1475 = vmatprep.subr.mxu0 0.0
    %1476 = vmatpush1.xpose.msra.mxu0 0.0
    %1477 = vmatprep.subr.mxu0 0.0
    %1478 = vmatpush1.xpose.msra.mxu0 0.0
    %1479 = vmatprep.subr.mxu0 0.0
    %1480 = vmatpush1.xpose.msra.mxu0 0.0
    %1481 = vmatprep.subr.mxu0 0.0
    %1482 = vmatpush1.xpose.msra.mxu0 0.0
    %1483 = vmatprep.subr.mxu0 0.0
    %1484 = vmatpush1.xpose.msra.mxu0 0.0
    %1485 = vmatprep.subr.mxu0 0.0
    %1486 = vmatpush1.xpose.msra.mxu0 0.0
    %1487 = vmatprep.subr.mxu0 0.0
    %1488 = vmatpush1.xpose.msra.mxu0 0.0
    %1489 = vmatprep.subr.mxu0 0.0
    %1490 = vmatpush1.xpose.msra.mxu0 0.0
    %1491 = vmatprep.subr.mxu0 0.0
    %1492 = vmatpush1.xpose.msra.mxu0 0.0
    %1493 = vmatprep.subr.mxu0 0.0
    %1494 = vmatpush1.xpose.msra.mxu0 0.0
    %1495 = vmatprep.subr.mxu0 0.0
    %1496 = vmatpush1.xpose.msra.mxu0 0.0
    %1497 = vmatprep.subr.mxu0 0.0
    %1498 = vmatpush1.xpose.msra.mxu0 0.0
    %1499 = vmatprep.subr.mxu0 0.0
    %1500 = vmatpush1.xpose.msra.mxu0 0.0
    %1501 = vmatprep.subr.mxu0 0.0
    %1502 = vmatpush1.xpose.msra.mxu0 0.0
    %1503 = vmatprep.subr.mxu0 0.0
    %1504 = vmatpush1.xpose.msra.mxu0 0.0
    %1505 = vmatprep.subr.mxu0 0.0
    %1506 = vmatpush1.xpose.msra.mxu0 0.0
    %1507 = vmatprep.subr.mxu0 0.0
    %1508 = vmatpush1.xpose.msra.mxu0 0.0
    %1509 = vmatprep.subr.mxu0 0.0
    %1510 = vmatpush1.xpose.msra.mxu0 0.0
    %1511 = vmatprep.subr.mxu0 0.0
    %1512 = vmatpush1.xpose.msra.mxu0 0.0
    %1513 = vmatprep.subr.mxu0 0.0
    %1514 = vmatpush1.xpose.msra.mxu0 0.0
    %1515 = vmatprep.subr.mxu0 0.0
    %1516 = vmatpush1.xpose.msra.mxu0 0.0
    %1517 = vmatprep.subr.mxu0 0.0
    %1518 = vmatpush1.xpose.msra.mxu0 0.0
    %1519 = vmatprep.subr.mxu0 0.0
    %1520 = vmatpush1.xpose.msra.mxu0 0.0
    %1521 = vmatprep.subr.mxu0 0.0
    %1522 = vmatpush1.xpose.msra.mxu0 0.0
    %1523 = vmatprep.mubr.f32.mxu0 0.0
    %1524 = vmatmul.mubr.f32.gmra.mrb[0].mxu0 %v1445
    %v1525 = vpop.f32.mrb[0].mxu0
    %v1526 = vadd.f32 0.0, %v1525
    %v1527 = vpop.f32.mrb[0].mxu0
    %1528 = vmatprep.mubr.f32.mxu0 0.0
    %1529 = vmatmul.mubr.f32.gmra.mrb[0].mxu0 %v1447
    %v1530 = vpop.f32.mrb[0].mxu0
    %v1531 = vadd.f32 0.0, %v1530
    %v1532 = vpop.f32.mrb[0].mxu0
    %1533 = vdwg.mxu0
    %v1534 = vmul.f32 %v1526, 0.35355338
    %v1535 = vmul.f32 %v1531, 0.35355338
    %v1536 = vadd.f32 %v1534, %v376
    %v1537 = vadd.f32 %v1535, %v377
    %v1538 = vsel %vm688, %v1536, -inf
    %1539 = vmax.xlane.f32.xlu0 %v1538
    %v1540 = vpop.xlane.xlu0 %1539
    %v1541 = vsel %vm692, %v1537, -inf
    %1542 = vmax.xlane.f32.xlu0 %v1541
    %v1543 = vpop.xlane.xlu0 %1542
    %v1544 = vsub.f32 %v1536, %v1540
    %v1545 = vsub.f32 %v1537, %v1543
    %v1546 = vmul.f32 %v1544, 1.442695
    %v1547 = vpow.pop %v1546
    %v1548 = vmul.f32 %v1545, 1.442695
    %v1549 = vpow.pop %v1548
    %v1551 = vsel %vm688, %v1547, 0
    %v1554 = vsel %vm688, %v1549, 0
    %1556 = vmatprep.subr.mxu0 0.0
    %1557 = vmatpush1.msra.mxu0 %v378
    %1558 = vmatprep.subr.mxu0 0.0
    %1559 = vmatpush1.msra.mxu0 %v379
    %1560 = vmatprep.subr.mxu0 0.0
    %1561 = vmatpush1.msra.mxu0 %v380
    %1562 = vmatprep.subr.mxu0 0.0
    %1563 = vmatpush1.msra.mxu0 %v381
    %1564 = vmatprep.subr.mxu0 0.0
    %1565 = vmatpush1.msra.mxu0 %v382
    %1566 = vmatprep.subr.mxu0 0.0
    %1567 = vmatpush1.msra.mxu0 0.0
    %1568 = vmatprep.subr.mxu0 0.0
    %1569 = vmatpush1.msra.mxu0 0.0
    %1570 = vmatprep.subr.mxu0 0.0
    %1571 = vmatpush1.msra.mxu0 0.0
    %1572 = vmatprep.subr.mxu0 0.0
    %1573 = vmatpush1.msra.mxu0 0.0
    %1574 = vmatprep.subr.mxu0 0.0
    %1575 = vmatpush1.msra.mxu0 0.0
    %1576 = vmatprep.subr.mxu0 0.0
    %1577 = vmatpush1.msra.mxu0 0.0
    %1578 = vmatprep.subr.mxu0 0.0
    %1579 = vmatpush1.msra.mxu0 0.0
    %1580 = vmatprep.subr.mxu0 0.0
    %1581 = vmatpush1.msra.mxu0 0.0
    %1582 = vmatprep.subr.mxu0 0.0
    %1583 = vmatpush1.msra.mxu0 0.0
    %1584 = vmatprep.subr.mxu0 0.0
    %1585 = vmatpush1.msra.mxu0 0.0
    %1586 = vmatprep.subr.mxu0 0.0
    %1587 = vmatpush1.msra.mxu0 0.0
    %1588 = vmatprep.subr.mxu0 0.0
    %1589 = vmatpush1.msra.mxu0 0.0
    %1590 = vmatprep.subr.mxu0 0.0
    %1591 = vmatpush1.msra.mxu0 0.0
    %1592 = vmatprep.subr.mxu0 0.0
    %1593 = vmatpush1.msra.mxu0 0.0
    %1594 = vmatprep.subr.mxu0 0.0
    %1595 = vmatpush1.msra.mxu0 0.0
    %1596 = vmatprep.subr.mxu0 0.0
    %1597 = vmatpush1.msra.mxu0 0.0
    %1598 = vmatprep.subr.mxu0 0.0
    %1599 = vmatpush1.msra.mxu0 0.0
    %1600 = vmatprep.subr.mxu0 0.0
    %1601 = vmatpush1.msra.mxu0 0.0
    %1602 = vmatprep.subr.mxu0 0.0
    %1603 = vmatpush1.msra.mxu0 0.0
    %1604 = vmatprep.subr.mxu0 0.0
    %1605 = vmatpush1.msra.mxu0 0.0
    %1606 = vmatprep.subr.mxu0 0.0
    %1607 = vmatpush1.msra.mxu0 0.0
    %1608 = vmatprep.subr.mxu0 0.0
    %1609 = vmatpush1.msra.mxu0 0.0
    %1610 = vmatprep.subr.mxu0 0.0
    %1611 = vmatpush1.msra.mxu0 0.0
    %1612 = vmatprep.subr.mxu0 0.0
    %1613 = vmatpush1.msra.mxu0 0.0
    %1614 = vmatprep.subr.mxu0 0.0
    %1615 = vmatpush1.msra.mxu0 0.0
    %1616 = vmatprep.subr.mxu0 0.0
    %1617 = vmatpush1.msra.mxu0 0.0
    %1618 = vmatprep.subr.mxu0 0.0
    %1619 = vmatpush1.msra.mxu0 0.0
    %1620 = vmatprep.mubr.f32.mxu0 0.0
    %1621 = vmatmul.mubr.f32.gmra.mrb[0].mxu0 %v1551
    %v1622 = vpop.f32.mrb[0].mxu0
    %v1623 = vadd.f32 0.0, %v1622
    %v1624 = vpop.f32.mrb[0].mxu0
    %1625 = vmatprep.mubr.f32.mxu0 0.0
    %1626 = vmatmul.mubr.f32.gmra.mrb[0].mxu0 %v1554
    %v1627 = vpop.f32.mrb[0].mxu0
    %v1628 = vadd.f32 0.0, %v1627
    %v1629 = vpop.f32.mrb[0].mxu0
    %1630 = vdwg.mxu0
    %v1631 = vrcp.pop %v1623
    %v1632 = vrcp.pop %v1628
    %v1633 = vmul.f32 %v1547, %v1631
    %v1634 = vmul.f32 %v1549, %v1632
    %1640 = vrot.lane.b32.xlu0 %v1425, 64
    %v1641 = vpop.permute.xlu0 %1640
    %1642 = vrot.lane.b32.xlu0 %v1426, 64
    %v1643 = vpop.permute.xlu0 %1642
    %1644 = vrot.lane.b32.xlu0 %v1427, 64
    %v1645 = vpop.permute.xlu0 %1644
    %1646 = vrot.lane.b32.xlu0 %v1428, 64
    %v1647 = vpop.permute.xlu0 %1646
    %1648 = vrot.lane.b32.xlu0 %v1429, 64
    %v1649 = vpop.permute.xlu0 %1648
    %v1656 = vsel %vm688, %v1633, 0
    %v1659 = vsel %vm688, %v1634, 0
    %1661 = vmatprep.subr.mxu0 0.0
    %1662 = vmatpush1.msra.mxu0 %v1641
    %1663 = vmatprep.subr.mxu0 0.0
    %1664 = vmatpush1.msra.mxu0 %v1643
    %1665 = vmatprep.subr.mxu0 0.0
    %1666 = vmatpush1.msra.mxu0 %v1645
    %1667 = vmatprep.subr.mxu0 0.0
    %1668 = vmatpush1.msra.mxu0 %v1647
    %1669 = vmatprep.subr.mxu0 0.0
    %1670 = vmatpush1.msra.mxu0 %v1649
    %1671 = vmatprep.subr.mxu0 0.0
    %1672 = vmatpush1.msra.mxu0 0.0
    %1673 = vmatprep.subr.mxu0 0.0
    %1674 = vmatpush1.msra.mxu0 0.0
    %1675 = vmatprep.subr.mxu0 0.0
    %1676 = vmatpush1.msra.mxu0 0.0
    %1677 = vmatprep.subr.mxu0 0.0
    %1678 = vmatpush1.msra.mxu0 0.0
    %1679 = vmatprep.subr.mxu0 0.0
    %1680 = vmatpush1.msra.mxu0 0.0
    %1681 = vmatprep.subr.mxu0 0.0
    %1682 = vmatpush1.msra.mxu0 0.0
    %1683 = vmatprep.subr.mxu0 0.0
    %1684 = vmatpush1.msra.mxu0 0.0
    %1685 = vmatprep.subr.mxu0 0.0
    %1686 = vmatpush1.msra.mxu0 0.0
    %1687 = vmatprep.subr.mxu0 0.0
    %1688 = vmatpush1.msra.mxu0 0.0
    %1689 = vmatprep.subr.mxu0 0.0
    %1690 = vmatpush1.msra.mxu0 0.0
    %1691 = vmatprep.subr.mxu0 0.0
    %1692 = vmatpush1.msra.mxu0 0.0
    %1693 = vmatprep.subr.mxu0 0.0
    %1694 = vmatpush1.msra.mxu0 0.0
    %1695 = vmatprep.subr.mxu0 0.0
    %1696 = vmatpush1.msra.mxu0 0.0
    %1697 = vmatprep.subr.mxu0 0.0
    %1698 = vmatpush1.msra.mxu0 0.0
    %1699 = vmatprep.subr.mxu0 0.0
    %1700 = vmatpush1.msra.mxu0 0.0
    %1701 = vmatprep.subr.mxu0 0.0
    %1702 = vmatpush1.msra.mxu0 0.0
    %1703 = vmatprep.subr.mxu0 0.0
    %1704 = vmatpush1.msra.mxu0 0.0
    %1705 = vmatprep.subr.mxu0 0.0
    %1706 = vmatpush1.msra.mxu0 0.0
    %1707 = vmatprep.subr.mxu0 0.0
    %1708 = vmatpush1.msra.mxu0 0.0
    %1709 = vmatprep.subr.mxu0 0.0
    %1710 = vmatpush1.msra.mxu0 0.0
    %1711 = vmatprep.subr.mxu0 0.0
    %1712 = vmatpush1.msra.mxu0 0.0
    %1713 = vmatprep.subr.mxu0 0.0
    %1714 = vmatpush1.msra.mxu0 0.0
    %1715 = vmatprep.subr.mxu0 0.0
    %1716 = vmatpush1.msra.mxu0 0.0
    %1717 = vmatprep.subr.mxu0 0.0
    %1718 = vmatpush1.msra.mxu0 0.0
    %1719 = vmatprep.subr.mxu0 0.0
    %1720 = vmatpush1.msra.mxu0 0.0
    %1721 = vmatprep.subr.mxu0 0.0
    %1722 = vmatpush1.msra.mxu0 0.0
    %1723 = vmatprep.subr.mxu0 0.0
    %1724 = vmatpush1.msra.mxu0 0.0
    %1725 = vmatprep.mubr.f32.mxu0 0.0
    %1726 = vmatmul.mubr.f32.gmra.mrb[0].mxu0 %v1656
    %v1727 = vpop.f32.mrb[0].mxu0
    %v1728 = vadd.f32 0.0, %v1727
    %v1729 = vpop.f32.mrb[0].mxu0
    %1730 = vmatprep.mubr.f32.mxu0 0.0
    %1731 = vmatmul.mubr.f32.gmra.mrb[0].mxu0 %v1659
    %v1732 = vpop.f32.mrb[0].mxu0
    %v1733 = vadd.f32 0.0, %v1732
    %v1734 = vpop.f32.mrb[0].mxu0
    %1735 = vdwg.mxu0
    %v1736 = vld [vmem:[%s53] sm:$0xff]
    %v1737 = vld [vmem:[%s53 + $0x8] sm:$0xff]
    %v1738 = vld [vmem:[%s53 + $0x10] sm:$0xff]
    %v1739 = vld [vmem:[%s53 + $0x18] sm:$0xff]
    %v1740 = vld [vmem:[%s55] sm:$0x1]
    %v1742 = vlaneseq
    %v1743 = vshrl.u32 %v1742, 7
    %v1744 = vsub.s32 0, %v1743
    %v1745 = vrot.slane %v1740, %v1744
    %v1748 = vsel %vm317, %v1728, 0
    %v1751 = vsel %vm317, %v1733, 0
    %1753 = vmatprep.subr.mxu0 0.0
    %1754 = vmatpush1.msra.mxu0 %v1736
    %1755 = vmatprep.subr.mxu0 0.0
    %1756 = vmatpush1.msra.mxu0 %v1737
    %1757 = vmatprep.subr.mxu0 0.0
    %1758 = vmatpush1.msra.mxu0 %v1738
    %1759 = vmatprep.subr.mxu0 0.0
    %1760 = vmatpush1.msra.mxu0 %v1739
    %1761 = vmatprep.subr.mxu0 0.0
    %1762 = vmatpush1.msra.mxu0 0.0
    %1763 = vmatprep.subr.mxu0 0.0
    %1764 = vmatpush1.msra.mxu0 0.0
    %1765 = vmatprep.subr.mxu0 0.0
    %1766 = vmatpush1.msra.mxu0 0.0
    %1767 = vmatprep.subr.mxu0 0.0
    %1768 = vmatpush1.msra.mxu0 0.0
    %1769 = vmatprep.subr.mxu0 0.0
    %1770 = vmatpush1.msra.mxu0 0.0
    %1771 = vmatprep.subr.mxu0 0.0
    %1772 = vmatpush1.msra.mxu0 0.0
    %1773 = vmatprep.subr.mxu0 0.0
    %1774 = vmatpush1.msra.mxu0 0.0
    %1775 = vmatprep.subr.mxu0 0.0
    %1776 = vmatpush1.msra.mxu0 0.0
    %1777 = vmatprep.subr.mxu0 0.0
    %1778 = vmatpush1.msra.mxu0 0.0
    %1779 = vmatprep.subr.mxu0 0.0
    %1780 = vmatpush1.msra.mxu0 0.0
    %1781 = vmatprep.subr.mxu0 0.0
    %1782 = vmatpush1.msra.mxu0 0.0
    %1783 = vmatprep.subr.mxu0 0.0
    %1784 = vmatpush1.msra.mxu0 0.0
    %1785 = vmatprep.subr.mxu0 0.0
    %1786 = vmatpush1.msra.mxu0 0.0
    %1787 = vmatprep.subr.mxu0 0.0
    %1788 = vmatpush1.msra.mxu0 0.0
    %1789 = vmatprep.subr.mxu0 0.0
    %1790 = vmatpush1.msra.mxu0 0.0
    %1791 = vmatprep.subr.mxu0 0.0
    %1792 = vmatpush1.msra.mxu0 0.0
    %1793 = vmatprep.subr.mxu0 0.0
    %1794 = vmatpush1.msra.mxu0 0.0
    %1795 = vmatprep.subr.mxu0 0.0
    %1796 = vmatpush1.msra.mxu0 0.0
    %1797 = vmatprep.subr.mxu0 0.0
    %1798 = vmatpush1.msra.mxu0 0.0
    %1799 = vmatprep.subr.mxu0 0.0
    %1800 = vmatpush1.msra.mxu0 0.0
    %1801 = vmatprep.subr.mxu0 0.0
    %1802 = vmatpush1.msra.mxu0 0.0
    %1803 = vmatprep.subr.mxu0 0.0
    %1804 = vmatpush1.msra.mxu0 0.0
    %1805 = vmatprep.subr.mxu0 0.0
    %1806 = vmatpush1.msra.mxu0 0.0
    %1807 = vmatprep.subr.mxu0 0.0
    %1808 = vmatpush1.msra.mxu0 0.0
    %1809 = vmatprep.subr.mxu0 0.0
    %1810 = vmatpush1.msra.mxu0 0.0
    %1811 = vmatprep.subr.mxu0 0.0
    %1812 = vmatpush1.msra.mxu0 0.0
    %1813 = vmatprep.subr.mxu0 0.0
    %1814 = vmatpush1.msra.mxu0 0.0
    %1815 = vmatprep.subr.mxu0 0.0
    %1816 = vmatpush1.msra.mxu0 0.0
    %1817 = vmatprep.mubr.f32.mxu0 0.0
    %1818 = vmatmul.mubr.f32.gmra.mrb[0].mxu0 %v1748
    %v1819 = vpop.f32.mrb[0].mxu0
    %v1820 = vadd.f32 %v1745, %v1819
    %v1821 = vpop.f32.mrb[0].mxu0
    %1822 = vmatprep.mubr.f32.mxu0 0.0
    %1823 = vmatmul.mubr.f32.gmra.mrb[0].mxu0 %v1751
    %v1824 = vpop.f32.mrb[0].mxu0
    %v1825 = vadd.f32 %v1745, %v1824
    %v1826 = vpop.f32.mrb[0].mxu0
    %1827 = vdwg.mxu0
    %v1828 = vadd.f32 %v1820, %v1269
    %v1829 = vadd.f32 %v1825, %v1270
    %v1830 = vld [vmem:[%s57] sm:$0x1]
    %v1831 = vld [vmem:[%s59] sm:$0x1]
    %v1832 = vsel %vm317, %v1828, 0.0
    %1833 = vadd.xlane.f32.xlu0 %v1832
    %v1834 = vpop.xlane.xlu0 %1833
    %v1835 = vsel %vm388, %v1829, 0.0
    %1836 = vadd.xlane.f32.xlu0 %v1835
    %v1837 = vpop.xlane.xlu0 %1836
    %v1838 = vmul.f32 %v1834, %v321
    %v1839 = vmul.f32 %v1837, %v321
    %v1840 = vsub.f32 %v1828, %v1838
    %v1841 = vsub.f32 %v1829, %v1839
    %v1842 = vmul.f32 %v1840, %v1840
    %v1843 = vmul.f32 %v1841, %v1841
    %v1844 = vsel %vm317, %v1842, 0.0
    %1845 = vadd.xlane.f32.xlu0 %v1844
    %v1846 = vpop.xlane.xlu0 %1845
    %v1847 = vsel %vm388, %v1843, 0.0
    %1848 = vadd.xlane.f32.xlu0 %v1847
    %v1849 = vpop.xlane.xlu0 %1848
    %v1850 = vmul.f32 %v1846, %v321
    %v1851 = vmul.f32 %v1849, %v321
    %v1852 = vadd.f32 %v1850, 1e-05
    %v1853 = vadd.f32 %v1851, 1e-05
    %v1854 = vrsqrt.pop %v1852
    %v1855 = vrsqrt.pop %v1853
    %v1856 = vmul.f32 %v1840, %v1854
    %v1857 = vmul.f32 %v1841, %v1855
    %v1859 = vlaneseq
    %v1860 = vshrl.u32 %v1859, 7
    %v1861 = vsub.s32 0, %v1860
    %v1862 = vrot.slane %v1830, %v1861
    %v1864 = vmul.f32 %v1856, %v1862
    %v1865 = vmul.f32 %v1857, %v1862
    %v1867 = vlaneseq
    %v1868 = vshrl.u32 %v1867, 7
    %v1869 = vsub.s32 0, %v1868
    %v1870 = vrot.slane %v1831, %v1869
    %v1872 = vadd.f32 %v1864, %v1870
    %v1873 = vadd.f32 %v1865, %v1870
    %v1874 = vld [vmem:[%s61] sm:$0xff]
    %v1875 = vld [vmem:[%s61 + $0x8] sm:$0xff]
    %v1876 = vld [vmem:[%s61 + $0x10] sm:$0xff]
    %v1877 = vld [vmem:[%s61 + $0x18] sm:$0xff]
    %v1878 = vld [vmem:[%s63] sm:$0x1]
    %v1880 = vlaneseq
    %v1881 = vshrl.u32 %v1880, 7
    %v1882 = vsub.s32 0, %v1881
    %v1883 = vrot.slane %v1878, %v1882
    %v1886 = vsel %vm317, %v1872, 0
    %v1889 = vsel %vm317, %v1873, 0
    %1891 = vmatprep.subr.mxu0 0.0
    %1892 = vmatpush1.msra.mxu0 %v1874
    %1893 = vmatprep.subr.mxu0 0.0
    %1894 = vmatpush1.msra.mxu0 %v1875
    %1895 = vmatprep.subr.mxu0 0.0
    %1896 = vmatpush1.msra.mxu0 %v1876
    %1897 = vmatprep.subr.mxu0 0.0
    %1898 = vmatpush1.msra.mxu0 %v1877
    %1899 = vmatprep.subr.mxu0 0.0
    %1900 = vmatpush1.msra.mxu0 0.0
    %1901 = vmatprep.subr.mxu0 0.0
    %1902 = vmatpush1.msra.mxu0 0.0
    %1903 = vmatprep.subr.mxu0 0.0
    %1904 = vmatpush1.msra.mxu0 0.0
    %1905 = vmatprep.subr.mxu0 0.0
    %1906 = vmatpush1.msra.mxu0 0.0
    %1907 = vmatprep.subr.mxu0 0.0
    %1908 = vmatpush1.msra.mxu0 0.0
    %1909 = vmatprep.subr.mxu0 0.0
    %1910 = vmatpush1.msra.mxu0 0.0
    %1911 = vmatprep.subr.mxu0 0.0
    %1912 = vmatpush1.msra.mxu0 0.0
    %1913 = vmatprep.subr.mxu0 0.0
    %1914 = vmatpush1.msra.mxu0 0.0
    %1915 = vmatprep.subr.mxu0 0.0
    %1916 = vmatpush1.msra.mxu0 0.0
    %1917 = vmatprep.subr.mxu0 0.0
    %1918 = vmatpush1.msra.mxu0 0.0
    %1919 = vmatprep.subr.mxu0 0.0
    %1920 = vmatpush1.msra.mxu0 0.0
    %1921 = vmatprep.subr.mxu0 0.0
    %1922 = vmatpush1.msra.mxu0 0.0
    %1923 = vmatprep.subr.mxu0 0.0
    %1924 = vmatpush1.msra.mxu0 0.0
    %1925 = vmatprep.subr.mxu0 0.0
    %1926 = vmatpush1.msra.mxu0 0.0
    %1927 = vmatprep.subr.mxu0 0.0
    %1928 = vmatpush1.msra.mxu0 0.0
    %1929 = vmatprep.subr.mxu0 0.0
    %1930 = vmatpush1.msra.mxu0 0.0
    %1931 = vmatprep.subr.mxu0 0.0
    %1932 = vmatpush1.msra.mxu0 0.0
    %1933 = vmatprep.subr.mxu0 0.0
    %1934 = vmatpush1.msra.mxu0 0.0
    %1935 = vmatprep.subr.mxu0 0.0
    %1936 = vmatpush1.msra.mxu0 0.0
    %1937 = vmatprep.subr.mxu0 0.0
    %1938 = vmatpush1.msra.mxu0 0.0
    %1939 = vmatprep.subr.mxu0 0.0
    %1940 = vmatpush1.msra.mxu0 0.0
    %1941 = vmatprep.subr.mxu0 0.0
    %1942 = vmatpush1.msra.mxu0 0.0
    %1943 = vmatprep.subr.mxu0 0.0
    %1944 = vmatpush1.msra.mxu0 0.0
    %1945 = vmatprep.subr.mxu0 0.0
    %1946 = vmatpush1.msra.mxu0 0.0
    %1947 = vmatprep.subr.mxu0 0.0
    %1948 = vmatpush1.msra.mxu0 0.0
    %1949 = vmatprep.subr.mxu0 0.0
    %1950 = vmatpush1.msra.mxu0 0.0
    %1951 = vmatprep.subr.mxu0 0.0
    %1952 = vmatpush1.msra.mxu0 0.0
    %1953 = vmatprep.subr.mxu0 0.0
    %1954 = vmatpush1.msra.mxu0 0.0
    %1955 = vmatprep.mubr.f32.mxu0 0.0
    %1956 = vmatmul.mubr.f32.gmra.mrb[0].mxu0 %v1886
    %v1957 = vpop.f32.mrb[0].mxu0
    %v1958 = vadd.f32 %v1883, %v1957
    %v1959 = vpop.f32.mrb[0].mxu0
    %1960 = vmatprep.mubr.f32.mxu0 0.0
    %1961 = vmatmul.mubr.f32.gmra.mrb[0].mxu0 %v1889
    %v1962 = vpop.f32.mrb[0].mxu0
    %v1963 = vadd.f32 %v1883, %v1962
    %v1964 = vpop.f32.mrb[0].mxu0
    %1965 = vdwg.mxu0
    %v1966 = vmul.f32 %v1958, 0.5
    %v1967 = vmul.f32 %v1963, 0.5
    %v1968 = vmul.f32 %v1958, 0.70710677
    %v1969 = vmul.f32 %v1963, 0.70710677
    %v1970 = vand.u32 2147483647, %v1968
    %v1971 = vand.u32 2147483647, %v1969
    %v1972 = vmul.f32 %v1970, 0.3275911
    %v1973 = vmul.f32 %v1971, 0.3275911
    %v1974 = vadd.f32 %v1972, 1.0
    %v1975 = vadd.f32 %v1973, 1.0
    %v1976 = vrcp.pop %v1974
    %v1977 = vmul.f32 1.0, %v1976
    %v1978 = vrcp.pop %v1975
    %v1979 = vmul.f32 1.0, %v1978
    %v1980 = vmul.f32 %v1977, 1.0614054
    %v1981 = vmul.f32 %v1979, 1.0614054
    %v1982 = vadd.f32 %v1980, -1.4531521
    %v1983 = vadd.f32 %v1981, -1.4531521
    %v1984 = vmul.f32 %v1982, %v1977
    %v1985 = vmul.f32 %v1983, %v1979
    %v1986 = vadd.f32 %v1984, 1.4214138
    %v1987 = vadd.f32 %v1985, 1.4214138
    %v1988 = vmul.f32 %v1986, %v1977
    %v1989 = vmul.f32 %v1987, %v1979
    %v1990 = vadd.f32 %v1988, -0.28449672
    %v1991 = vadd.f32 %v1989, -0.28449672
    %v1992 = vmul.f32 %v1990, %v1977
    %v1993 = vmul.f32 %v1991, %v1979
    %v1994 = vadd.f32 %v1992, 0.2548296
    %v1995 = vadd.f32 %v1993, 0.2548296
    %v1996 = vmul.f32 %v1994, %v1977
    %v1997 = vmul.f32 %v1995, %v1979
    %v1998 = vsub.f32 0.0, %v1970
    %v1999 = vsub.f32 0.0, %v1971
    %v2000 = vmul.f32 %v1998, %v1970
    %v2001 = vmul.f32 %v1999, %v1971
    %v2002 = vmul.f32 %v2000, 1.442695
    %v2003 = vpow.pop %v2002
    %v2004 = vmul.f32 %v2001, 1.442695
    %v2005 = vpow.pop %v2004
    %v2006 = vmul.f32 %v1996, %v2003
    %v2007 = vmul.f32 %v1997, %v2005
    %v2008 = vsub.f32 1.0, %v2006
    %v2009 = vsub.f32 1.0, %v2007
    %vm2010 = vcmp.ge.f32.partialorder %v1968, 0.0
    %vm2011 = vcmp.ge.f32.partialorder %v1969, 0.0
    %v2012 = vsub.f32 0.0, %v2008
    %v2013 = vsub.f32 0.0, %v2009
    %v2014 = vsel %vm2010, %v2008, %v2012
    %v2015 = vsel %vm2011, %v2009, %v2013
    %v2016 = vadd.f32 %v2014, 1.0
    %v2017 = vadd.f32 %v2015, 1.0
    %v2018 = vmul.f32 %v1966, %v2016
    %v2019 = vmul.f32 %v1967, %v2017
    %v2020 = vld [vmem:[%s65] sm:$0xff]
    %v2021 = vld [vmem:[%s65 + $0x8] sm:$0xff]
    %v2022 = vld [vmem:[%s65 + $0x10] sm:$0xff]
    %v2023 = vld [vmem:[%s65 + $0x18] sm:$0xff]
    %v2024 = vld [vmem:[%s65 + $0x20] sm:$0xff]
    %v2025 = vld [vmem:[%s65 + $0x28] sm:$0xff]
    %v2026 = vld [vmem:[%s65 + $0x30] sm:$0xff]
    %v2027 = vld [vmem:[%s65 + $0x38] sm:$0xff]
    %v2028 = vld [vmem:[%s67] sm:$0x1]
    %v2030 = vlaneseq
    %v2031 = vshrl.u32 %v2030, 7
    %v2032 = vsub.s32 0, %v2031
    %v2033 = vrot.slane %v2028, %v2032
    %v2036 = vsel %vm1187, %v2018, 0
    %v2039 = vsel %vm1187, %v2019, 0
    %2041 = vmatprep.subr.mxu0 0.0
    %2042 = vmatpush1.msra.mxu0 %v2020
    %2043 = vmatprep.subr.mxu0 0.0
    %2044 = vmatpush1.msra.mxu0 %v2021
    %2045 = vmatprep.subr.mxu0 0.0
    %2046 = vmatpush1.msra.mxu0 %v2022
    %2047 = vmatprep.subr.mxu0 0.0
    %2048 = vmatpush1.msra.mxu0 %v2023
    %2049 = vmatprep.subr.mxu0 0.0
    %2050 = vmatpush1.msra.mxu0 %v2024
    %2051 = vmatprep.subr.mxu0 0.0
    %2052 = vmatpush1.msra.mxu0 %v2025
    %2053 = vmatprep.subr.mxu0 0.0
    %2054 = vmatpush1.msra.mxu0 %v2026
    %2055 = vmatprep.subr.mxu0 0.0
    %2056 = vmatpush1.msra.mxu0 %v2027
    %2057 = vmatprep.subr.mxu0 0.0
    %2058 = vmatpush1.msra.mxu0 0.0
    %2059 = vmatprep.subr.mxu0 0.0
    %2060 = vmatpush1.msra.mxu0 0.0
    %2061 = vmatprep.subr.mxu0 0.0
    %2062 = vmatpush1.msra.mxu0 0.0
    %2063 = vmatprep.subr.mxu0 0.0
    %2064 = vmatpush1.msra.mxu0 0.0
    %2065 = vmatprep.subr.mxu0 0.0
    %2066 = vmatpush1.msra.mxu0 0.0
    %2067 = vmatprep.subr.mxu0 0.0
    %2068 = vmatpush1.msra.mxu0 0.0
    %2069 = vmatprep.subr.mxu0 0.0
    %2070 = vmatpush1.msra.mxu0 0.0
    %2071 = vmatprep.subr.mxu0 0.0
    %2072 = vmatpush1.msra.mxu0 0.0
    %2073 = vmatprep.subr.mxu0 0.0
    %2074 = vmatpush1.msra.mxu0 0.0
    %2075 = vmatprep.subr.mxu0 0.0
    %2076 = vmatpush1.msra.mxu0 0.0
    %2077 = vmatprep.subr.mxu0 0.0
    %2078 = vmatpush1.msra.mxu0 0.0
    %2079 = vmatprep.subr.mxu0 0.0
    %2080 = vmatpush1.msra.mxu0 0.0
    %2081 = vmatprep.subr.mxu0 0.0
    %2082 = vmatpush1.msra.mxu0 0.0
    %2083 = vmatprep.subr.mxu0 0.0
    %2084 = vmatpush1.msra.mxu0 0.0
    %2085 = vmatprep.subr.mxu0 0.0
    %2086 = vmatpush1.msra.mxu0 0.0
    %2087 = vmatprep.subr.mxu0 0.0
    %2088 = vmatpush1.msra.mxu0 0.0
    %2089 = vmatprep.subr.mxu0 0.0
    %2090 = vmatpush1.msra.mxu0 0.0
    %2091 = vmatprep.subr.mxu0 0.0
    %2092 = vmatpush1.msra.mxu0 0.0
    %2093 = vmatprep.subr.mxu0 0.0
    %2094 = vmatpush1.msra.mxu0 0.0
    %2095 = vmatprep.subr.mxu0 0.0
    %2096 = vmatpush1.msra.mxu0 0.0
    %2097 = vmatprep.subr.mxu0 0.0
    %2098 = vmatpush1.msra.mxu0 0.0
    %2099 = vmatprep.subr.mxu0 0.0
    %2100 = vmatpush1.msra.mxu0 0.0
    %2101 = vmatprep.subr.mxu0 0.0
    %2102 = vmatpush1.msra.mxu0 0.0
    %2103 = vmatprep.subr.mxu0 0.0
    %2104 = vmatpush1.msra.mxu0 0.0
    %2105 = vmatprep.mubr.f32.mxu0 0.0
    %2106 = vmatmul.mubr.f32.gmra.mrb[0].mxu0 %v2036
    %v2107 = vpop.f32.mrb[0].mxu0
    %v2108 = vadd.f32 %v2033, %v2107
    %v2109 = vpop.f32.mrb[0].mxu0
    %2110 = vmatprep.mubr.f32.mxu0 0.0
    %2111 = vmatmul.mubr.f32.gmra.mrb[0].mxu0 %v2039
    %v2112 = vpop.f32.mrb[0].mxu0
    %v2113 = vpop.f32.mrb[0].mxu0
    %2114 = vdwg.mxu0
    %v2115 = vadd.f32 %v2108, %v1828
    %v2116 = vld [vmem:[%s69] sm:$0x1]
    %v2117 = vld [vmem:[%s71] sm:$0x1]
    %v2118 = vsel %vm317, %v2115, 0.0
    %2119 = vadd.xlane.f32.xlu0 %v2118
    %v2120 = vpop.xlane.xlu0 %2119
    %v2121 = vmul.f32 %v2120, %v321
    %v2122 = vsub.f32 %v2115, %v2121
    %v2123 = vmul.f32 %v2122, %v2122
    %v2124 = vsel %vm317, %v2123, 0.0
    %2125 = vadd.xlane.f32.xlu0 %v2124
    %v2126 = vpop.xlane.xlu0 %2125
    %v2127 = vmul.f32 %v2126, %v321
    %v2128 = vadd.f32 %v2127, 1e-05
    %v2129 = vrsqrt.pop %v2128
    %v2130 = vmul.f32 %v2122, %v2129
    %v2132 = vlaneseq
    %v2133 = vshrl.u32 %v2132, 7
    %v2134 = vsub.s32 0, %v2133
    %v2135 = vrot.slane %v2116, %v2134
    %v2137 = vmul.f32 %v2130, %v2135
    %v2139 = vlaneseq
    %v2140 = vshrl.u32 %v2139, 7
    %v2141 = vsub.s32 0, %v2140
    %v2142 = vrot.slane %v2117, %v2141
    %v2144 = vadd.f32 %v2137, %v2142
    %v2146 = vrot.slane %v2144, 4
    %v2148 = vsel %vm359, %v2144, %v2146
    %v2149 = vld [vmem:[%s73] sm:$0xff]
    %v2150 = vld [vmem:[%s73 + $0x8] sm:$0xff]
    %v2151 = vld [vmem:[%s73 + $0x10] sm:$0xff]
    %v2152 = vld [vmem:[%s73 + $0x18] sm:$0xff]
    %v2153 = vld [vmem:[%s75] sm:$0x1]
    %v2155 = vlaneseq
    %v2156 = vshrl.u32 %v2155, 7
    %v2157 = vsub.s32 0, %v2156
    %v2158 = vrot.slane %v2153, %v2157
    %v2161 = vsel %vm317, %v2148, 0
    %2163 = vmatprep.subr.mxu0 0.0
    %2164 = vmatpush1.msra.mxu0 %v2149
    %2165 = vmatprep.subr.mxu0 0.0
    %2166 = vmatpush1.msra.mxu0 %v2150
    %2167 = vmatprep.subr.mxu0 0.0
    %2168 = vmatpush1.msra.mxu0 %v2151
    %2169 = vmatprep.subr.mxu0 0.0
    %2170 = vmatpush1.msra.mxu0 %v2152
    %2171 = vmatprep.subr.mxu0 0.0
    %2172 = vmatpush1.msra.mxu0 0.0
    %2173 = vmatprep.subr.mxu0 0.0
    %2174 = vmatpush1.msra.mxu0 0.0
    %2175 = vmatprep.subr.mxu0 0.0
    %2176 = vmatpush1.msra.mxu0 0.0
    %2177 = vmatprep.subr.mxu0 0.0
    %2178 = vmatpush1.msra.mxu0 0.0
    %2179 = vmatprep.subr.mxu0 0.0
    %2180 = vmatpush1.msra.mxu0 0.0
    %2181 = vmatprep.subr.mxu0 0.0
    %2182 = vmatpush1.msra.mxu0 0.0
    %2183 = vmatprep.subr.mxu0 0.0
    %2184 = vmatpush1.msra.mxu0 0.0
    %2185 = vmatprep.subr.mxu0 0.0
    %2186 = vmatpush1.msra.mxu0 0.0
    %2187 = vmatprep.subr.mxu0 0.0
    %2188 = vmatpush1.msra.mxu0 0.0
    %2189 = vmatprep.subr.mxu0 0.0
    %2190 = vmatpush1.msra.mxu0 0.0
    %2191 = vmatprep.subr.mxu0 0.0
    %2192 = vmatpush1.msra.mxu0 0.0
    %2193 = vmatprep.subr.mxu0 0.0
    %2194 = vmatpush1.msra.mxu0 0.0
    %2195 = vmatprep.subr.mxu0 0.0
    %2196 = vmatpush1.msra.mxu0 0.0
    %2197 = vmatprep.subr.mxu0 0.0
    %2198 = vmatpush1.msra.mxu0 0.0
    %2199 = vmatprep.subr.mxu0 0.0
    %2200 = vmatpush1.msra.mxu0 0.0
    %2201 = vmatprep.subr.mxu0 0.0
    %2202 = vmatpush1.msra.mxu0 0.0
    %2203 = vmatprep.subr.mxu0 0.0
    %2204 = vmatpush1.msra.mxu0 0.0
    %2205 = vmatprep.subr.mxu0 0.0
    %2206 = vmatpush1.msra.mxu0 0.0
    %2207 = vmatprep.subr.mxu0 0.0
    %2208 = vmatpush1.msra.mxu0 0.0
    %2209 = vmatprep.subr.mxu0 0.0
    %2210 = vmatpush1.msra.mxu0 0.0
    %2211 = vmatprep.subr.mxu0 0.0
    %2212 = vmatpush1.msra.mxu0 0.0
    %2213 = vmatprep.subr.mxu0 0.0
    %2214 = vmatpush1.msra.mxu0 0.0
    %2215 = vmatprep.subr.mxu0 0.0
    %2216 = vmatpush1.msra.mxu0 0.0
    %2217 = vmatprep.subr.mxu0 0.0
    %2218 = vmatpush1.msra.mxu0 0.0
    %2219 = vmatprep.subr.mxu0 0.0
    %2220 = vmatpush1.msra.mxu0 0.0
    %2221 = vmatprep.subr.mxu0 0.0
    %2222 = vmatpush1.msra.mxu0 0.0
    %2223 = vmatprep.subr.mxu0 0.0
    %2224 = vmatpush1.msra.mxu0 0.0
    %2225 = vmatprep.subr.mxu0 0.0
    %2226 = vmatpush1.msra.mxu0 0.0
    %2227 = vmatprep.mubr.f32.mxu0 0.0
    %2228 = vmatmul.mubr.f32.gmra.mrb[0].mxu0 %v2161
    %v2229 = vpop.f32.mrb[0].mxu0
    %v2230 = vadd.f32 %v2158, %v2229
    %v2231 = vpop.f32.mrb[0].mxu0
    %2232 = vdwg.mxu0
    %vm2233 = vcmask 74752
    %2234 = vst.msk [vmem:[#allocation2] sm:$0x3] %vm2233, %v2230
    // Predicated region
    $region154: #{vit_forward.1} parent=1 // pred_check
      _
    $region155: #{vit_forward.1} parent=1 // pred_check_branch
      %2236 = sbr.rel (0) target = $region157
    $region156: #{vit_forward.1} parent=1 // pred_region
      %s2238 = ssub.s32 32, 32
      %2239 = vsyncadd [#allocation3], %s2238
      %s2241 = sshll.u32 [#allocation2], 4
      %s2242 = int_to_ptr.vmem [resolvable:$true] %s2241
      %2244 = dma.vmem_to_hbm [thread:$0]  %s2242, 32, %s77, [#allocation3]
    $region157: #{vit_forward.1} parent=1 // pred_fallthru
      _
    // Predicated region
    $region158: #{vit_forward.1} parent=1 // pred_check
      _
    $region159: #{vit_forward.1} parent=1 // pred_check_branch
      %2246 = sbr.rel (0) target = $region161
    $region160: #{vit_forward.1} parent=1 // pred_region
      %2247 = dma.done [#allocation3], 32
    $region161: #{vit_forward.1} parent=1 // pred_fallthru
      _
    %2248 = vsyncpa [#allocation3], 1

</llo_original>
